<compile_context>
chip_gen: v6e
topology: v6e:2x2x1
jax: 0.10.0
libtpu: 0.0.40
codegen_flags: <defaults>
</compile_context>

<pallas_src>
import functools

import jax
import jax.numpy as jnp
import numpy as np
from jax.experimental import pallas as pl
from jax.experimental.pallas import tpu as pltpu


def _gate_deconv_kernel(x_ref, w_ref, b_ref, o_ref, *, k_f, C_out, F_out):
    """One block of T_blk frames.

    x_ref : VMEM (K, T_blk, F_up)   K = k_t*C_in, F_up = F*s_f (freq pre-upsampled
                                    with zeros -> kernel only does lane shifts)
    w_ref : SMEM (k_f*2*C_out, K)   w[kf*C2 + co, j*C_in + c] = weight[c, co, k_t-1-j, kf]
    b_ref : SMEM (2*C_out,)
    o_ref : VMEM (C_out, T_blk, F_out)   freq (lane-dense-ish) on the last axis
    """
    C2 = 2 * C_out
    K = x_ref.shape[0]
    T_blk = x_ref.shape[1]

    # Load the K input planes once; each is (T_blk, F_up) with freq on lanes.
    xs = [x_ref[k] for k in range(K)]

    def contract(row):
        # y[t, f] = sum_k w[row, k] * x[k, t, f]
        # K is tiny, so this is exact f32 scalar*vector FMAs on the VPU
        # (no MXU push/drain, no bf16 rounding).  For large K/C this would
        # become a single fused jnp.dot on the MXU instead.
        acc = w_ref[row, 0] * xs[0]
        for k in range(1, K):
            acc = acc + w_ref[row, k] * xs[k]
        return acc                                    # (T_blk, F_up)

    def preact(ch):
        # Transposed-conv frequency taps: shift tap kf right by kf lanes and sum.
        # Partial sums stay in vregs; no scratch accumulator, no RMW scatter.
        acc = None
        for kf in range(k_f):
            y = contract(kf * C2 + ch)
            parts = []
            if kf > 0:
                parts.append(jnp.zeros((T_blk, kf), jnp.float32))
            parts.append(y)
            if k_f - 1 - kf > 0:
                parts.append(jnp.zeros((T_blk, k_f - 1 - kf), jnp.float32))
            y = parts[0] if len(parts) == 1 else jnp.concatenate(parts, axis=-1)
            acc = y if acc is None else acc + y       # (T_blk, F_up + k_f - 1)
        return acc[:, :F_out] + b_ref[ch]

    # GLU gate; value/gate channels are separate rows of the (row-major) output,
    # so the gating is a plain VPU multiply (no lane realignment).
    for co in range(C_out):
        val = preact(co)
        gate = preact(C_out + co)
        o_ref[co] = val * jax.nn.sigmoid(gate)        # write each row exactly once


def prepare_gate_deconv_params(weight, bias, kernel_size):
    """One-time static weight prep (hoisted off the per-call hot path).

    weight: (C_in, 2*C_out, k_t, k_f)  (torch ConvTranspose2d layout), bias: (2*C_out,)
    """
    k_t, k_f = kernel_size
    C2 = weight.shape[1]
    C_in = weight.shape[0]
    w_flip = weight[:, :, ::-1, :]                    # flip the time kernel
    # W[kf*C2 + co, j*C_in + c] = weight[c, co, k_t-1-j, kf]
    W = jnp.transpose(w_flip, (3, 1, 2, 0)).reshape(k_f * C2, k_t * C_in)
    return W.astype(jnp.float32), bias.reshape(C2).astype(jnp.float32)


@functools.partial(jax.jit, static_argnames=("kernel_size", "stride", "frames_per_block"))
def gate_conv_transpose2d_fw(inputs, states, W, b, *, kernel_size, stride,
                             frames_per_block=None):
    """Streaming gated ConvTranspose2d over T frames in one call.

    inputs : (1, C_in, T, F)   T >= 1 frames (T=1 == the PyTorch module's forward)
    states : (1, C_in, k_t-1, F)
    W, b   : from prepare_gate_deconv_params
    returns: out (1, C_out, T, F_out), new_states (1, C_in, k_t-1, F)
    """
    k_t, k_f = kernel_size
    s_t, s_f = stride
    assert s_t == 1, "only stride[0]==1 is supported (as in the PyTorch module)"
    B, C_in, T, F = inputs.shape
    assert B == 1
    C2 = W.shape[0] // k_f
    C_out = C2 // 2
    K = k_t * C_in
    F_out = (F - 1) * s_f + k_f
    F_up = F * s_f

    full = jnp.concatenate([states, inputs], axis=2)           # (1, C_in, k_t-1+T, F)
    new_states = full[:, :, T:]                                # last k_t-1 frames

    # Kernel input: X[j*C_in + c, t, f*s_f] = full[0, c, t+j, f]
    # (sliding time window + zero-upsampled freq, built once in plain JAX so the
    #  kernel never needs an in-kernel interleave/relayout).
    full0 = full[0].astype(jnp.float32)
    X = jnp.stack([full0[:, j:j + T, :] for j in range(k_t)], axis=0)  # (k_t,C_in,T,F)
    X = X.reshape(K, T, F)
    if s_f > 1:
        X = jnp.concatenate(
            [X[..., None], jnp.zeros((K, T, F, s_f - 1), jnp.float32)],
            axis=-1).reshape(K, T, F_up)

    # Frame tiling (block second-minor dim must be a multiple of 8 or the full T).
    T_blk = frames_per_block if frames_per_block is not None else T
    if T % T_blk != 0 or (T_blk != T and T_blk % 8 != 0):
        T_blk = T
    n_blk = T // T_blk

    kernel = functools.partial(_gate_deconv_kernel, k_f=k_f, C_out=C_out, F_out=F_out)

    grid_spec = pltpu.PrefetchScalarGridSpec(
        num_scalar_prefetch=0,
        grid=(n_blk,),
        in_specs=[
            pl.BlockSpec((K, T_blk, F_up), lambda i: (0, i, 0)),            # VMEM
            pl.BlockSpec(memory_space=pltpu.MemorySpace.SMEM),              # weights
            pl.BlockSpec(memory_space=pltpu.MemorySpace.SMEM),              # bias
        ],
        out_specs=pl.BlockSpec((C_out, T_blk, F_out), lambda i: (0, i, 0)),
    )

    out = pl.pallas_call(
        kernel,
        out_shape=jax.ShapeDtypeStruct((C_out, T, F_out), jnp.float32),
        grid_spec=grid_spec,
        compiler_params=pltpu.CompilerParams(
            dimension_semantics=("parallel",)),   # frame blocks shard across v7x's 2 TCs
    )(X, W, b)

    return out[None], new_states                  # (1, C_out, T, F_out) — no transpose


def _reference(inputs, states, weight, bias, kernel_size, stride):
    """Frame-by-frame float64 numpy reference of the PyTorch module."""
    k_t, k_f = kernel_size
    s_f = stride[1]
    x_in = np.asarray(inputs, np.float64)[0]       # (C_in, T, F)
    st = np.asarray(states, np.float64)[0]         # (C_in, k_t-1, F)
    w = np.asarray(weight, np.float64)             # (C_in, C2, k_t, k_f)
    b = np.asarray(bias, np.float64)
    C_in, C2 = w.shape[0], w.shape[1]
    C_out = C2 // 2
    T, F = x_in.shape[1], x_in.shape[2]
    F_out = (F - 1) * s_f + k_f
    outs = np.zeros((C_out, T, F_out))
    for t in range(T):
        win = np.concatenate([st, x_in[:, t:t + 1, :]], axis=1)   # (C_in, k_t, F)
        st = win[:, 1:, :]
        y = np.tile(b[:, None], (1, F_out))
        for ci in range(C_in):
            for j in range(k_t):
                for fi in range(F):
                    for kf in range(k_f):
                        y[:, fi * s_f + kf] += win[ci, j, fi] * w[ci, :, k_t - 1 - j, kf]
        outs[:, t, :] = y[:C_out] * (1.0 / (1.0 + np.exp(-y[C_out:])))
    return outs[None], st[None]


if __name__ == "__main__":
    C_in, C_out = 4, 4
    kernel_size = (2, 3)       # (k_t, k_f)
    stride = (1, 2)            # (1, s_f)
    F = 16                     # input freq bins
    T = 16                     # streamed frames batched into one call
    k_t, k_f = kernel_size

    key = jax.random.PRNGKey(0)
    k1, k2, k3, k4 = jax.random.split(key, 4)
    inputs = jax.random.normal(k1, (1, C_in, T, F), dtype=jnp.float32)
    states = jax.random.normal(k2, (1, C_in, k_t - 1, F), dtype=jnp.float32)
    weight = 0.1 * jax.random.normal(k3, (C_in, 2 * C_out, k_t, k_f), dtype=jnp.float32)
    bias = 0.1 * jax.random.normal(k4, (2 * C_out,), dtype=jnp.float32)

    # Static weight prep: done once, not per frame.
    W, b = prepare_gate_deconv_params(weight, bias, kernel_size)

    # Batched streaming call (16 frames, 2 frame-blocks of 8 -> grid=(2,), parallel).
    out, new_states = gate_conv_transpose2d_fw(
        inputs, states, W, b,
        kernel_size=kernel_size, stride=stride, frames_per_block=8)
    out = jax.block_until_ready(out)
    new_states = jax.block_until_ready(new_states)

    ref_out, ref_states = _reference(inputs, states, weight, bias, kernel_size, stride)
    assert out.shape == ref_out.shape, (out.shape, ref_out.shape)
    np.testing.assert_allclose(np.asarray(out), ref_out, atol=1e-4, rtol=1e-4)
    np.testing.assert_allclose(np.asarray(new_states), ref_states, atol=0, rtol=0)

    # Single-frame call (exact PyTorch module interface: T == 1).
    out1, st1 = gate_conv_transpose2d_fw(
        inputs[:, :, :1], states, W, b, kernel_size=kernel_size, stride=stride)
    out1 = jax.block_until_ready(out1)
    np.testing.assert_allclose(np.asarray(out1), ref_out[:, :, :1], atol=1e-4, rtol=1e-4)
    exp_st1 = np.concatenate([np.asarray(states), np.asarray(inputs[:, :, :1])],
                             axis=2)[:, :, 1:]
    np.testing.assert_allclose(np.asarray(st1), exp_st1, atol=0, rtol=0)

    print("KERNEL_OK")
</pallas_src>

<mosaic_0001>
module attributes {stable_mosaic.version = 11 : i64} {
  func.func @_gate_deconv_kernel(%arg0: i32, %arg1: memref<8x8x32xf32, #tpu.memory_space<vmem>>, %arg2: memref<24x8xf32, #tpu.memory_space<smem>>, %arg3: memref<8xf32, #tpu.memory_space<smem>>, %arg4: memref<4x8x33xf32, #tpu.memory_space<vmem>>) attributes {dimension_semantics = [#tpu.dimension_semantics<parallel>], iteration_bounds = array<i64: 2>, scalar_prefetch = 0 : i64, scratch_operands = 0 : i64, tpu.core_type = #tpu.core_type<tc>, window_params = [{transform_indices = @transform_0, window_bounds = array<i64: 8, 8, 32>}, {transform_indices = @transform_1, window_bounds = array<i64: 24, 8>}, {transform_indices = @transform_2, window_bounds = array<i64: 8>}, {transform_indices = @transform_3, window_bounds = array<i64: 4, 8, 33>}]} {
    %c0 = arith.constant 0 : index
    %c0_0 = arith.constant 0 : index
    %c0_1 = arith.constant 0 : index
    %0 = vector.load %arg1[%c0, %c0_0, %c0_1] : memref<8x8x32xf32, #tpu.memory_space<vmem>>, vector<1x8x32xf32>
    %1 = vector.shape_cast %0 : vector<1x8x32xf32> to vector<8x32xf32>
    %c1 = arith.constant 1 : index
    %c0_2 = arith.constant 0 : index
    %c0_3 = arith.constant 0 : index
    %2 = vector.load %arg1[%c1, %c0_2, %c0_3] : memref<8x8x32xf32, #tpu.memory_space<vmem>>, vector<1x8x32xf32>
    %3 = vector.shape_cast %2 : vector<1x8x32xf32> to vector<8x32xf32>
    %c2 = arith.constant 2 : index
    %c0_4 = arith.constant 0 : index
    %c0_5 = arith.constant 0 : index
    %4 = vector.load %arg1[%c2, %c0_4, %c0_5] : memref<8x8x32xf32, #tpu.memory_space<vmem>>, vector<1x8x32xf32>
    %5 = vector.shape_cast %4 : vector<1x8x32xf32> to vector<8x32xf32>
    %c3 = arith.constant 3 : index
    %c0_6 = arith.constant 0 : index
    %c0_7 = arith.constant 0 : index
    %6 = vector.load %arg1[%c3, %c0_6, %c0_7] : memref<8x8x32xf32, #tpu.memory_space<vmem>>, vector<1x8x32xf32>
    %7 = vector.shape_cast %6 : vector<1x8x32xf32> to vector<8x32xf32>
    %c4 = arith.constant 4 : index
    %c0_8 = arith.constant 0 : index
    %c0_9 = arith.constant 0 : index
    %8 = vector.load %arg1[%c4, %c0_8, %c0_9] : memref<8x8x32xf32, #tpu.memory_space<vmem>>, vector<1x8x32xf32>
    %9 = vector.shape_cast %8 : vector<1x8x32xf32> to vector<8x32xf32>
    %c5 = arith.constant 5 : index
    %c0_10 = arith.constant 0 : index
    %c0_11 = arith.constant 0 : index
    %10 = vector.load %arg1[%c5, %c0_10, %c0_11] : memref<8x8x32xf32, #tpu.memory_space<vmem>>, vector<1x8x32xf32>
    %11 = vector.shape_cast %10 : vector<1x8x32xf32> to vector<8x32xf32>
    %c6 = arith.constant 6 : index
    %c0_12 = arith.constant 0 : index
    %c0_13 = arith.constant 0 : index
    %12 = vector.load %arg1[%c6, %c0_12, %c0_13] : memref<8x8x32xf32, #tpu.memory_space<vmem>>, vector<1x8x32xf32>
    %13 = vector.shape_cast %12 : vector<1x8x32xf32> to vector<8x32xf32>
    %c7 = arith.constant 7 : index
    %c0_14 = arith.constant 0 : index
    %c0_15 = arith.constant 0 : index
    %14 = vector.load %arg1[%c7, %c0_14, %c0_15] : memref<8x8x32xf32, #tpu.memory_space<vmem>>, vector<1x8x32xf32>
    %15 = vector.shape_cast %14 : vector<1x8x32xf32> to vector<8x32xf32>
    %c0_16 = arith.constant 0 : index
    %c0_17 = arith.constant 0 : index
    %16 = memref.load %arg2[%c0_16, %c0_17] : memref<24x8xf32, #tpu.memory_space<smem>>
    %17 = vector.broadcast %16 : f32 to vector<8x32xf32>
    %18 = arith.mulf %17, %1 : vector<8x32xf32>
    %c0_18 = arith.constant 0 : index
    %c1_19 = arith.constant 1 : index
    %19 = memref.load %arg2[%c0_18, %c1_19] : memref<24x8xf32, #tpu.memory_space<smem>>
    %20 = vector.broadcast %19 : f32 to vector<8x32xf32>
    %21 = arith.mulf %20, %3 : vector<8x32xf32>
    %22 = arith.addf %18, %21 : vector<8x32xf32>
    %c0_20 = arith.constant 0 : index
    %c2_21 = arith.constant 2 : index
    %23 = memref.load %arg2[%c0_20, %c2_21] : memref<24x8xf32, #tpu.memory_space<smem>>
    %24 = vector.broadcast %23 : f32 to vector<8x32xf32>
    %25 = arith.mulf %24, %5 : vector<8x32xf32>
    %26 = arith.addf %22, %25 : vector<8x32xf32>
    %c0_22 = arith.constant 0 : index
    %c3_23 = arith.constant 3 : index
    %27 = memref.load %arg2[%c0_22, %c3_23] : memref<24x8xf32, #tpu.memory_space<smem>>
    %28 = vector.broadcast %27 : f32 to vector<8x32xf32>
    %29 = arith.mulf %28, %7 : vector<8x32xf32>
    %30 = arith.addf %26, %29 : vector<8x32xf32>
    %c0_24 = arith.constant 0 : index
    %c4_25 = arith.constant 4 : index
    %31 = memref.load %arg2[%c0_24, %c4_25] : memref<24x8xf32, #tpu.memory_space<smem>>
    %32 = vector.broadcast %31 : f32 to vector<8x32xf32>
    %33 = arith.mulf %32, %9 : vector<8x32xf32>
    %34 = arith.addf %30, %33 : vector<8x32xf32>
    %c0_26 = arith.constant 0 : index
    %c5_27 = arith.constant 5 : index
    %35 = memref.load %arg2[%c0_26, %c5_27] : memref<24x8xf32, #tpu.memory_space<smem>>
    %36 = vector.broadcast %35 : f32 to vector<8x32xf32>
    %37 = arith.mulf %36, %11 : vector<8x32xf32>
    %38 = arith.addf %34, %37 : vector<8x32xf32>
    %c0_28 = arith.constant 0 : index
    %c6_29 = arith.constant 6 : index
    %39 = memref.load %arg2[%c0_28, %c6_29] : memref<24x8xf32, #tpu.memory_space<smem>>
    %40 = vector.broadcast %39 : f32 to vector<8x32xf32>
    %41 = arith.mulf %40, %13 : vector<8x32xf32>
    %42 = arith.addf %38, %41 : vector<8x32xf32>
    %c0_30 = arith.constant 0 : index
    %c7_31 = arith.constant 7 : index
    %43 = memref.load %arg2[%c0_30, %c7_31] : memref<24x8xf32, #tpu.memory_space<smem>>
    %44 = vector.broadcast %43 : f32 to vector<8x32xf32>
    %45 = arith.mulf %44, %15 : vector<8x32xf32>
    %46 = arith.addf %42, %45 : vector<8x32xf32>
    %cst = arith.constant 0.000000e+00 : f32
    %47 = vector.broadcast %cst : f32 to vector<8x2xf32>
    %48 = tpu.concatenate %46, %47 in 1 : vector<8x32xf32>, vector<8x2xf32> -> vector<8x34xf32>
    %c8 = arith.constant 8 : index
    %c0_32 = arith.constant 0 : index
    %49 = memref.load %arg2[%c8, %c0_32] : memref<24x8xf32, #tpu.memory_space<smem>>
    %50 = vector.broadcast %49 : f32 to vector<8x32xf32>
    %51 = arith.mulf %50, %1 : vector<8x32xf32>
    %c8_33 = arith.constant 8 : index
    %c1_34 = arith.constant 1 : index
    %52 = memref.load %arg2[%c8_33, %c1_34] : memref<24x8xf32, #tpu.memory_space<smem>>
    %53 = vector.broadcast %52 : f32 to vector<8x32xf32>
    %54 = arith.mulf %53, %3 : vector<8x32xf32>
    %55 = arith.addf %51, %54 : vector<8x32xf32>
    %c8_35 = arith.constant 8 : index
    %c2_36 = arith.constant 2 : index
    %56 = memref.load %arg2[%c8_35, %c2_36] : memref<24x8xf32, #tpu.memory_space<smem>>
    %57 = vector.broadcast %56 : f32 to vector<8x32xf32>
    %58 = arith.mulf %57, %5 : vector<8x32xf32>
    %59 = arith.addf %55, %58 : vector<8x32xf32>
    %c8_37 = arith.constant 8 : index
    %c3_38 = arith.constant 3 : index
    %60 = memref.load %arg2[%c8_37, %c3_38] : memref<24x8xf32, #tpu.memory_space<smem>>
    %61 = vector.broadcast %60 : f32 to vector<8x32xf32>
    %62 = arith.mulf %61, %7 : vector<8x32xf32>
    %63 = arith.addf %59, %62 : vector<8x32xf32>
    %c8_39 = arith.constant 8 : index
    %c4_40 = arith.constant 4 : index
    %64 = memref.load %arg2[%c8_39, %c4_40] : memref<24x8xf32, #tpu.memory_space<smem>>
    %65 = vector.broadcast %64 : f32 to vector<8x32xf32>
    %66 = arith.mulf %65, %9 : vector<8x32xf32>
    %67 = arith.addf %63, %66 : vector<8x32xf32>
    %c8_41 = arith.constant 8 : index
    %c5_42 = arith.constant 5 : index
    %68 = memref.load %arg2[%c8_41, %c5_42] : memref<24x8xf32, #tpu.memory_space<smem>>
    %69 = vector.broadcast %68 : f32 to vector<8x32xf32>
    %70 = arith.mulf %69, %11 : vector<8x32xf32>
    %71 = arith.addf %67, %70 : vector<8x32xf32>
    %c8_43 = arith.constant 8 : index
    %c6_44 = arith.constant 6 : index
    %72 = memref.load %arg2[%c8_43, %c6_44] : memref<24x8xf32, #tpu.memory_space<smem>>
    %73 = vector.broadcast %72 : f32 to vector<8x32xf32>
    %74 = arith.mulf %73, %13 : vector<8x32xf32>
    %75 = arith.addf %71, %74 : vector<8x32xf32>
    %c8_45 = arith.constant 8 : index
    %c7_46 = arith.constant 7 : index
    %76 = memref.load %arg2[%c8_45, %c7_46] : memref<24x8xf32, #tpu.memory_space<smem>>
    %77 = vector.broadcast %76 : f32 to vector<8x32xf32>
    %78 = arith.mulf %77, %15 : vector<8x32xf32>
    %79 = arith.addf %75, %78 : vector<8x32xf32>
    %cst_47 = arith.constant 0.000000e+00 : f32
    %80 = vector.broadcast %cst_47 : f32 to vector<8x1xf32>
    %cst_48 = arith.constant 0.000000e+00 : f32
    %81 = vector.broadcast %cst_48 : f32 to vector<8x1xf32>
    %82 = tpu.concatenate %80, %79, %81 in 1 : vector<8x1xf32>, vector<8x32xf32>, vector<8x1xf32> -> vector<8x34xf32>
    %83 = arith.addf %48, %82 : vector<8x34xf32>
    %c16 = arith.constant 16 : index
    %c0_49 = arith.constant 0 : index
    %84 = memref.load %arg2[%c16, %c0_49] : memref<24x8xf32, #tpu.memory_space<smem>>
    %85 = vector.broadcast %84 : f32 to vector<8x32xf32>
    %86 = arith.mulf %85, %1 : vector<8x32xf32>
    %c16_50 = arith.constant 16 : index
    %c1_51 = arith.constant 1 : index
    %87 = memref.load %arg2[%c16_50, %c1_51] : memref<24x8xf32, #tpu.memory_space<smem>>
    %88 = vector.broadcast %87 : f32 to vector<8x32xf32>
    %89 = arith.mulf %88, %3 : vector<8x32xf32>
    %90 = arith.addf %86, %89 : vector<8x32xf32>
    %c16_52 = arith.constant 16 : index
    %c2_53 = arith.constant 2 : index
    %91 = memref.load %arg2[%c16_52, %c2_53] : memref<24x8xf32, #tpu.memory_space<smem>>
    %92 = vector.broadcast %91 : f32 to vector<8x32xf32>
    %93 = arith.mulf %92, %5 : vector<8x32xf32>
    %94 = arith.addf %90, %93 : vector<8x32xf32>
    %c16_54 = arith.constant 16 : index
    %c3_55 = arith.constant 3 : index
    %95 = memref.load %arg2[%c16_54, %c3_55] : memref<24x8xf32, #tpu.memory_space<smem>>
    %96 = vector.broadcast %95 : f32 to vector<8x32xf32>
    %97 = arith.mulf %96, %7 : vector<8x32xf32>
    %98 = arith.addf %94, %97 : vector<8x32xf32>
    %c16_56 = arith.constant 16 : index
    %c4_57 = arith.constant 4 : index
    %99 = memref.load %arg2[%c16_56, %c4_57] : memref<24x8xf32, #tpu.memory_space<smem>>
    %100 = vector.broadcast %99 : f32 to vector<8x32xf32>
    %101 = arith.mulf %100, %9 : vector<8x32xf32>
    %102 = arith.addf %98, %101 : vector<8x32xf32>
    %c16_58 = arith.constant 16 : index
    %c5_59 = arith.constant 5 : index
    %103 = memref.load %arg2[%c16_58, %c5_59] : memref<24x8xf32, #tpu.memory_space<smem>>
    %104 = vector.broadcast %103 : f32 to vector<8x32xf32>
    %105 = arith.mulf %104, %11 : vector<8x32xf32>
    %106 = arith.addf %102, %105 : vector<8x32xf32>
    %c16_60 = arith.constant 16 : index
    %c6_61 = arith.constant 6 : index
    %107 = memref.load %arg2[%c16_60, %c6_61] : memref<24x8xf32, #tpu.memory_space<smem>>
    %108 = vector.broadcast %107 : f32 to vector<8x32xf32>
    %109 = arith.mulf %108, %13 : vector<8x32xf32>
    %110 = arith.addf %106, %109 : vector<8x32xf32>
    %c16_62 = arith.constant 16 : index
    %c7_63 = arith.constant 7 : index
    %111 = memref.load %arg2[%c16_62, %c7_63] : memref<24x8xf32, #tpu.memory_space<smem>>
    %112 = vector.broadcast %111 : f32 to vector<8x32xf32>
    %113 = arith.mulf %112, %15 : vector<8x32xf32>
    %114 = arith.addf %110, %113 : vector<8x32xf32>
    %cst_64 = arith.constant 0.000000e+00 : f32
    %115 = vector.broadcast %cst_64 : f32 to vector<8x2xf32>
    %116 = tpu.concatenate %115, %114 in 1 : vector<8x2xf32>, vector<8x32xf32> -> vector<8x34xf32>
    %117 = arith.addf %83, %116 : vector<8x34xf32>
    %118 = vector.extract_strided_slice %117 {offsets = [0, 0], sizes = [8, 33], strides = [1, 1]} : vector<8x34xf32> to vector<8x33xf32>
    %c0_65 = arith.constant 0 : index
    %119 = memref.load %arg3[%c0_65] : memref<8xf32, #tpu.memory_space<smem>>
    %120 = vector.broadcast %119 : f32 to vector<8x33xf32>
    %121 = arith.addf %118, %120 : vector<8x33xf32>
    %c4_66 = arith.constant 4 : index
    %c0_67 = arith.constant 0 : index
    %122 = memref.load %arg2[%c4_66, %c0_67] : memref<24x8xf32, #tpu.memory_space<smem>>
    %123 = vector.broadcast %122 : f32 to vector<8x32xf32>
    %124 = arith.mulf %123, %1 : vector<8x32xf32>
    %c4_68 = arith.constant 4 : index
    %c1_69 = arith.constant 1 : index
    %125 = memref.load %arg2[%c4_68, %c1_69] : memref<24x8xf32, #tpu.memory_space<smem>>
    %126 = vector.broadcast %125 : f32 to vector<8x32xf32>
    %127 = arith.mulf %126, %3 : vector<8x32xf32>
    %128 = arith.addf %124, %127 : vector<8x32xf32>
    %c4_70 = arith.constant 4 : index
    %c2_71 = arith.constant 2 : index
    %129 = memref.load %arg2[%c4_70, %c2_71] : memref<24x8xf32, #tpu.memory_space<smem>>
    %130 = vector.broadcast %129 : f32 to vector<8x32xf32>
    %131 = arith.mulf %130, %5 : vector<8x32xf32>
    %132 = arith.addf %128, %131 : vector<8x32xf32>
    %c4_72 = arith.constant 4 : index
    %c3_73 = arith.constant 3 : index
    %133 = memref.load %arg2[%c4_72, %c3_73] : memref<24x8xf32, #tpu.memory_space<smem>>
    %134 = vector.broadcast %133 : f32 to vector<8x32xf32>
    %135 = arith.mulf %134, %7 : vector<8x32xf32>
    %136 = arith.addf %132, %135 : vector<8x32xf32>
    %c4_74 = arith.constant 4 : index
    %c4_75 = arith.constant 4 : index
    %137 = memref.load %arg2[%c4_74, %c4_75] : memref<24x8xf32, #tpu.memory_space<smem>>
    %138 = vector.broadcast %137 : f32 to vector<8x32xf32>
    %139 = arith.mulf %138, %9 : vector<8x32xf32>
    %140 = arith.addf %136, %139 : vector<8x32xf32>
    %c4_76 = arith.constant 4 : index
    %c5_77 = arith.constant 5 : index
    %141 = memref.load %arg2[%c4_76, %c5_77] : memref<24x8xf32, #tpu.memory_space<smem>>
    %142 = vector.broadcast %141 : f32 to vector<8x32xf32>
    %143 = arith.mulf %142, %11 : vector<8x32xf32>
    %144 = arith.addf %140, %143 : vector<8x32xf32>
    %c4_78 = arith.constant 4 : index
    %c6_79 = arith.constant 6 : index
    %145 = memref.load %arg2[%c4_78, %c6_79] : memref<24x8xf32, #tpu.memory_space<smem>>
    %146 = vector.broadcast %145 : f32 to vector<8x32xf32>
    %147 = arith.mulf %146, %13 : vector<8x32xf32>
    %148 = arith.addf %144, %147 : vector<8x32xf32>
    %c4_80 = arith.constant 4 : index
    %c7_81 = arith.constant 7 : index
    %149 = memref.load %arg2[%c4_80, %c7_81] : memref<24x8xf32, #tpu.memory_space<smem>>
    %150 = vector.broadcast %149 : f32 to vector<8x32xf32>
    %151 = arith.mulf %150, %15 : vector<8x32xf32>
    %152 = arith.addf %148, %151 : vector<8x32xf32>
    %cst_82 = arith.constant 0.000000e+00 : f32
    %153 = vector.broadcast %cst_82 : f32 to vector<8x2xf32>
    %154 = tpu.concatenate %152, %153 in 1 : vector<8x32xf32>, vector<8x2xf32> -> vector<8x34xf32>
    %c12 = arith.constant 12 : index
    %c0_83 = arith.constant 0 : index
    %155 = memref.load %arg2[%c12, %c0_83] : memref<24x8xf32, #tpu.memory_space<smem>>
    %156 = vector.broadcast %155 : f32 to vector<8x32xf32>
    %157 = arith.mulf %156, %1 : vector<8x32xf32>
    %c12_84 = arith.constant 12 : index
    %c1_85 = arith.constant 1 : index
    %158 = memref.load %arg2[%c12_84, %c1_85] : memref<24x8xf32, #tpu.memory_space<smem>>
    %159 = vector.broadcast %158 : f32 to vector<8x32xf32>
    %160 = arith.mulf %159, %3 : vector<8x32xf32>
    %161 = arith.addf %157, %160 : vector<8x32xf32>
    %c12_86 = arith.constant 12 : index
    %c2_87 = arith.constant 2 : index
    %162 = memref.load %arg2[%c12_86, %c2_87] : memref<24x8xf32, #tpu.memory_space<smem>>
    %163 = vector.broadcast %162 : f32 to vector<8x32xf32>
    %164 = arith.mulf %163, %5 : vector<8x32xf32>
    %165 = arith.addf %161, %164 : vector<8x32xf32>
    %c12_88 = arith.constant 12 : index
    %c3_89 = arith.constant 3 : index
    %166 = memref.load %arg2[%c12_88, %c3_89] : memref<24x8xf32, #tpu.memory_space<smem>>
    %167 = vector.broadcast %166 : f32 to vector<8x32xf32>
    %168 = arith.mulf %167, %7 : vector<8x32xf32>
    %169 = arith.addf %165, %168 : vector<8x32xf32>
    %c12_90 = arith.constant 12 : index
    %c4_91 = arith.constant 4 : index
    %170 = memref.load %arg2[%c12_90, %c4_91] : memref<24x8xf32, #tpu.memory_space<smem>>
    %171 = vector.broadcast %170 : f32 to vector<8x32xf32>
    %172 = arith.mulf %171, %9 : vector<8x32xf32>
    %173 = arith.addf %169, %172 : vector<8x32xf32>
    %c12_92 = arith.constant 12 : index
    %c5_93 = arith.constant 5 : index
    %174 = memref.load %arg2[%c12_92, %c5_93] : memref<24x8xf32, #tpu.memory_space<smem>>
    %175 = vector.broadcast %174 : f32 to vector<8x32xf32>
    %176 = arith.mulf %175, %11 : vector<8x32xf32>
    %177 = arith.addf %173, %176 : vector<8x32xf32>
    %c12_94 = arith.constant 12 : index
    %c6_95 = arith.constant 6 : index
    %178 = memref.load %arg2[%c12_94, %c6_95] : memref<24x8xf32, #tpu.memory_space<smem>>
    %179 = vector.broadcast %178 : f32 to vector<8x32xf32>
    %180 = arith.mulf %179, %13 : vector<8x32xf32>
    %181 = arith.addf %177, %180 : vector<8x32xf32>
    %c12_96 = arith.constant 12 : index
    %c7_97 = arith.constant 7 : index
    %182 = memref.load %arg2[%c12_96, %c7_97] : memref<24x8xf32, #tpu.memory_space<smem>>
    %183 = vector.broadcast %182 : f32 to vector<8x32xf32>
    %184 = arith.mulf %183, %15 : vector<8x32xf32>
    %185 = arith.addf %181, %184 : vector<8x32xf32>
    %cst_98 = arith.constant 0.000000e+00 : f32
    %186 = vector.broadcast %cst_98 : f32 to vector<8x1xf32>
    %cst_99 = arith.constant 0.000000e+00 : f32
    %187 = vector.broadcast %cst_99 : f32 to vector<8x1xf32>
    %188 = tpu.concatenate %186, %185, %187 in 1 : vector<8x1xf32>, vector<8x32xf32>, vector<8x1xf32> -> vector<8x34xf32>
    %189 = arith.addf %154, %188 : vector<8x34xf32>
    %c20 = arith.constant 20 : index
    %c0_100 = arith.constant 0 : index
    %190 = memref.load %arg2[%c20, %c0_100] : memref<24x8xf32, #tpu.memory_space<smem>>
    %191 = vector.broadcast %190 : f32 to vector<8x32xf32>
    %192 = arith.mulf %191, %1 : vector<8x32xf32>
    %c20_101 = arith.constant 20 : index
    %c1_102 = arith.constant 1 : index
    %193 = memref.load %arg2[%c20_101, %c1_102] : memref<24x8xf32, #tpu.memory_space<smem>>
    %194 = vector.broadcast %193 : f32 to vector<8x32xf32>
    %195 = arith.mulf %194, %3 : vector<8x32xf32>
    %196 = arith.addf %192, %195 : vector<8x32xf32>
    %c20_103 = arith.constant 20 : index
    %c2_104 = arith.constant 2 : index
    %197 = memref.load %arg2[%c20_103, %c2_104] : memref<24x8xf32, #tpu.memory_space<smem>>
    %198 = vector.broadcast %197 : f32 to vector<8x32xf32>
    %199 = arith.mulf %198, %5 : vector<8x32xf32>
    %200 = arith.addf %196, %199 : vector<8x32xf32>
    %c20_105 = arith.constant 20 : index
    %c3_106 = arith.constant 3 : index
    %201 = memref.load %arg2[%c20_105, %c3_106] : memref<24x8xf32, #tpu.memory_space<smem>>
    %202 = vector.broadcast %201 : f32 to vector<8x32xf32>
    %203 = arith.mulf %202, %7 : vector<8x32xf32>
    %204 = arith.addf %200, %203 : vector<8x32xf32>
    %c20_107 = arith.constant 20 : index
    %c4_108 = arith.constant 4 : index
    %205 = memref.load %arg2[%c20_107, %c4_108] : memref<24x8xf32, #tpu.memory_space<smem>>
    %206 = vector.broadcast %205 : f32 to vector<8x32xf32>
    %207 = arith.mulf %206, %9 : vector<8x32xf32>
    %208 = arith.addf %204, %207 : vector<8x32xf32>
    %c20_109 = arith.constant 20 : index
    %c5_110 = arith.constant 5 : index
    %209 = memref.load %arg2[%c20_109, %c5_110] : memref<24x8xf32, #tpu.memory_space<smem>>
    %210 = vector.broadcast %209 : f32 to vector<8x32xf32>
    %211 = arith.mulf %210, %11 : vector<8x32xf32>
    %212 = arith.addf %208, %211 : vector<8x32xf32>
    %c20_111 = arith.constant 20 : index
    %c6_112 = arith.constant 6 : index
    %213 = memref.load %arg2[%c20_111, %c6_112] : memref<24x8xf32, #tpu.memory_space<smem>>
    %214 = vector.broadcast %213 : f32 to vector<8x32xf32>
    %215 = arith.mulf %214, %13 : vector<8x32xf32>
    %216 = arith.addf %212, %215 : vector<8x32xf32>
    %c20_113 = arith.constant 20 : index
    %c7_114 = arith.constant 7 : index
    %217 = memref.load %arg2[%c20_113, %c7_114] : memref<24x8xf32, #tpu.memory_space<smem>>
    %218 = vector.broadcast %217 : f32 to vector<8x32xf32>
    %219 = arith.mulf %218, %15 : vector<8x32xf32>
    %220 = arith.addf %216, %219 : vector<8x32xf32>
    %cst_115 = arith.constant 0.000000e+00 : f32
    %221 = vector.broadcast %cst_115 : f32 to vector<8x2xf32>
    %222 = tpu.concatenate %221, %220 in 1 : vector<8x2xf32>, vector<8x32xf32> -> vector<8x34xf32>
    %223 = arith.addf %189, %222 : vector<8x34xf32>
    %224 = vector.extract_strided_slice %223 {offsets = [0, 0], sizes = [8, 33], strides = [1, 1]} : vector<8x34xf32> to vector<8x33xf32>
    %c4_116 = arith.constant 4 : index
    %225 = memref.load %arg3[%c4_116] : memref<8xf32, #tpu.memory_space<smem>>
    %226 = vector.broadcast %225 : f32 to vector<8x33xf32>
    %227 = arith.addf %224, %226 : vector<8x33xf32>
    %228 = arith.negf %227 : vector<8x33xf32>
    %229 = math.exp %228 : vector<8x33xf32>
    %cst_117 = arith.constant 1.000000e+00 : f32
    %230 = vector.broadcast %cst_117 : f32 to vector<8x33xf32>
    %231 = arith.addf %230, %229 : vector<8x33xf32>
    %232 = arith.divf %230, %231 : vector<8x33xf32>
    %233 = arith.mulf %121, %232 : vector<8x33xf32>
    %c0_118 = arith.constant 0 : index
    %c0_119 = arith.constant 0 : index
    %c0_120 = arith.constant 0 : index
    %234 = vector.load %arg4[%c0_118, %c0_119, %c0_120] : memref<4x8x33xf32, #tpu.memory_space<vmem>>, vector<1x8x33xf32>
    %235 = vector.shape_cast %234 : vector<1x8x33xf32> to vector<8x33xf32>
    %236 = vector.shape_cast %233 : vector<8x33xf32> to vector<1x8x33xf32>
    tpu.vector_store %arg4[%c0_118, %c0_119, %c0_120], %236 {strides = array<i32>} : memref<4x8x33xf32, #tpu.memory_space<vmem>>, vector<1x8x33xf32>,
    %c1_121 = arith.constant 1 : index
    %c0_122 = arith.constant 0 : index
    %237 = memref.load %arg2[%c1_121, %c0_122] : memref<24x8xf32, #tpu.memory_space<smem>>
    %238 = vector.broadcast %237 : f32 to vector<8x32xf32>
    %239 = arith.mulf %238, %1 : vector<8x32xf32>
    %c1_123 = arith.constant 1 : index
    %c1_124 = arith.constant 1 : index
    %240 = memref.load %arg2[%c1_123, %c1_124] : memref<24x8xf32, #tpu.memory_space<smem>>
    %241 = vector.broadcast %240 : f32 to vector<8x32xf32>
    %242 = arith.mulf %241, %3 : vector<8x32xf32>
    %243 = arith.addf %239, %242 : vector<8x32xf32>
    %c1_125 = arith.constant 1 : index
    %c2_126 = arith.constant 2 : index
    %244 = memref.load %arg2[%c1_125, %c2_126] : memref<24x8xf32, #tpu.memory_space<smem>>
    %245 = vector.broadcast %244 : f32 to vector<8x32xf32>
    %246 = arith.mulf %245, %5 : vector<8x32xf32>
    %247 = arith.addf %243, %246 : vector<8x32xf32>
    %c1_127 = arith.constant 1 : index
    %c3_128 = arith.constant 3 : index
    %248 = memref.load %arg2[%c1_127, %c3_128] : memref<24x8xf32, #tpu.memory_space<smem>>
    %249 = vector.broadcast %248 : f32 to vector<8x32xf32>
    %250 = arith.mulf %249, %7 : vector<8x32xf32>
    %251 = arith.addf %247, %250 : vector<8x32xf32>
    %c1_129 = arith.constant 1 : index
    %c4_130 = arith.constant 4 : index
    %252 = memref.load %arg2[%c1_129, %c4_130] : memref<24x8xf32, #tpu.memory_space<smem>>
    %253 = vector.broadcast %252 : f32 to vector<8x32xf32>
    %254 = arith.mulf %253, %9 : vector<8x32xf32>
    %255 = arith.addf %251, %254 : vector<8x32xf32>
    %c1_131 = arith.constant 1 : index
    %c5_132 = arith.constant 5 : index
    %256 = memref.load %arg2[%c1_131, %c5_132] : memref<24x8xf32, #tpu.memory_space<smem>>
    %257 = vector.broadcast %256 : f32 to vector<8x32xf32>
    %258 = arith.mulf %257, %11 : vector<8x32xf32>
    %259 = arith.addf %255, %258 : vector<8x32xf32>
    %c1_133 = arith.constant 1 : index
    %c6_134 = arith.constant 6 : index
    %260 = memref.load %arg2[%c1_133, %c6_134] : memref<24x8xf32, #tpu.memory_space<smem>>
    %261 = vector.broadcast %260 : f32 to vector<8x32xf32>
    %262 = arith.mulf %261, %13 : vector<8x32xf32>
    %263 = arith.addf %259, %262 : vector<8x32xf32>
    %c1_135 = arith.constant 1 : index
    %c7_136 = arith.constant 7 : index
    %264 = memref.load %arg2[%c1_135, %c7_136] : memref<24x8xf32, #tpu.memory_space<smem>>
    %265 = vector.broadcast %264 : f32 to vector<8x32xf32>
    %266 = arith.mulf %265, %15 : vector<8x32xf32>
    %267 = arith.addf %263, %266 : vector<8x32xf32>
    %cst_137 = arith.constant 0.000000e+00 : f32
    %268 = vector.broadcast %cst_137 : f32 to vector<8x2xf32>
    %269 = tpu.concatenate %267, %268 in 1 : vector<8x32xf32>, vector<8x2xf32> -> vector<8x34xf32>
    %c9 = arith.constant 9 : index
    %c0_138 = arith.constant 0 : index
    %270 = memref.load %arg2[%c9, %c0_138] : memref<24x8xf32, #tpu.memory_space<smem>>
    %271 = vector.broadcast %270 : f32 to vector<8x32xf32>
    %272 = arith.mulf %271, %1 : vector<8x32xf32>
    %c9_139 = arith.constant 9 : index
    %c1_140 = arith.constant 1 : index
    %273 = memref.load %arg2[%c9_139, %c1_140] : memref<24x8xf32, #tpu.memory_space<smem>>
    %274 = vector.broadcast %273 : f32 to vector<8x32xf32>
    %275 = arith.mulf %274, %3 : vector<8x32xf32>
    %276 = arith.addf %272, %275 : vector<8x32xf32>
    %c9_141 = arith.constant 9 : index
    %c2_142 = arith.constant 2 : index
    %277 = memref.load %arg2[%c9_141, %c2_142] : memref<24x8xf32, #tpu.memory_space<smem>>
    %278 = vector.broadcast %277 : f32 to vector<8x32xf32>
    %279 = arith.mulf %278, %5 : vector<8x32xf32>
    %280 = arith.addf %276, %279 : vector<8x32xf32>
    %c9_143 = arith.constant 9 : index
    %c3_144 = arith.constant 3 : index
    %281 = memref.load %arg2[%c9_143, %c3_144] : memref<24x8xf32, #tpu.memory_space<smem>>
    %282 = vector.broadcast %281 : f32 to vector<8x32xf32>
    %283 = arith.mulf %282, %7 : vector<8x32xf32>
    %284 = arith.addf %280, %283 : vector<8x32xf32>
    %c9_145 = arith.constant 9 : index
    %c4_146 = arith.constant 4 : index
    %285 = memref.load %arg2[%c9_145, %c4_146] : memref<24x8xf32, #tpu.memory_space<smem>>
    %286 = vector.broadcast %285 : f32 to vector<8x32xf32>
    %287 = arith.mulf %286, %9 : vector<8x32xf32>
    %288 = arith.addf %284, %287 : vector<8x32xf32>
    %c9_147 = arith.constant 9 : index
    %c5_148 = arith.constant 5 : index
    %289 = memref.load %arg2[%c9_147, %c5_148] : memref<24x8xf32, #tpu.memory_space<smem>>
    %290 = vector.broadcast %289 : f32 to vector<8x32xf32>
    %291 = arith.mulf %290, %11 : vector<8x32xf32>
    %292 = arith.addf %288, %291 : vector<8x32xf32>
    %c9_149 = arith.constant 9 : index
    %c6_150 = arith.constant 6 : index
    %293 = memref.load %arg2[%c9_149, %c6_150] : memref<24x8xf32, #tpu.memory_space<smem>>
    %294 = vector.broadcast %293 : f32 to vector<8x32xf32>
    %295 = arith.mulf %294, %13 : vector<8x32xf32>
    %296 = arith.addf %292, %295 : vector<8x32xf32>
    %c9_151 = arith.constant 9 : index
    %c7_152 = arith.constant 7 : index
    %297 = memref.load %arg2[%c9_151, %c7_152] : memref<24x8xf32, #tpu.memory_space<smem>>
    %298 = vector.broadcast %297 : f32 to vector<8x32xf32>
    %299 = arith.mulf %298, %15 : vector<8x32xf32>
    %300 = arith.addf %296, %299 : vector<8x32xf32>
    %cst_153 = arith.constant 0.000000e+00 : f32
    %301 = vector.broadcast %cst_153 : f32 to vector<8x1xf32>
    %cst_154 = arith.constant 0.000000e+00 : f32
    %302 = vector.broadcast %cst_154 : f32 to vector<8x1xf32>
    %303 = tpu.concatenate %301, %300, %302 in 1 : vector<8x1xf32>, vector<8x32xf32>, vector<8x1xf32> -> vector<8x34xf32>
    %304 = arith.addf %269, %303 : vector<8x34xf32>
    %c17 = arith.constant 17 : index
    %c0_155 = arith.constant 0 : index
    %305 = memref.load %arg2[%c17, %c0_155] : memref<24x8xf32, #tpu.memory_space<smem>>
    %306 = vector.broadcast %305 : f32 to vector<8x32xf32>
    %307 = arith.mulf %306, %1 : vector<8x32xf32>
    %c17_156 = arith.constant 17 : index
    %c1_157 = arith.constant 1 : index
    %308 = memref.load %arg2[%c17_156, %c1_157] : memref<24x8xf32, #tpu.memory_space<smem>>
    %309 = vector.broadcast %308 : f32 to vector<8x32xf32>
    %310 = arith.mulf %309, %3 : vector<8x32xf32>
    %311 = arith.addf %307, %310 : vector<8x32xf32>
    %c17_158 = arith.constant 17 : index
    %c2_159 = arith.constant 2 : index
    %312 = memref.load %arg2[%c17_158, %c2_159] : memref<24x8xf32, #tpu.memory_space<smem>>
    %313 = vector.broadcast %312 : f32 to vector<8x32xf32>
    %314 = arith.mulf %313, %5 : vector<8x32xf32>
    %315 = arith.addf %311, %314 : vector<8x32xf32>
    %c17_160 = arith.constant 17 : index
    %c3_161 = arith.constant 3 : index
    %316 = memref.load %arg2[%c17_160, %c3_161] : memref<24x8xf32, #tpu.memory_space<smem>>
    %317 = vector.broadcast %316 : f32 to vector<8x32xf32>
    %318 = arith.mulf %317, %7 : vector<8x32xf32>
    %319 = arith.addf %315, %318 : vector<8x32xf32>
    %c17_162 = arith.constant 17 : index
    %c4_163 = arith.constant 4 : index
    %320 = memref.load %arg2[%c17_162, %c4_163] : memref<24x8xf32, #tpu.memory_space<smem>>
    %321 = vector.broadcast %320 : f32 to vector<8x32xf32>
    %322 = arith.mulf %321, %9 : vector<8x32xf32>
    %323 = arith.addf %319, %322 : vector<8x32xf32>
    %c17_164 = arith.constant 17 : index
    %c5_165 = arith.constant 5 : index
    %324 = memref.load %arg2[%c17_164, %c5_165] : memref<24x8xf32, #tpu.memory_space<smem>>
    %325 = vector.broadcast %324 : f32 to vector<8x32xf32>
    %326 = arith.mulf %325, %11 : vector<8x32xf32>
    %327 = arith.addf %323, %326 : vector<8x32xf32>
    %c17_166 = arith.constant 17 : index
    %c6_167 = arith.constant 6 : index
    %328 = memref.load %arg2[%c17_166, %c6_167] : memref<24x8xf32, #tpu.memory_space<smem>>
    %329 = vector.broadcast %328 : f32 to vector<8x32xf32>
    %330 = arith.mulf %329, %13 : vector<8x32xf32>
    %331 = arith.addf %327, %330 : vector<8x32xf32>
    %c17_168 = arith.constant 17 : index
    %c7_169 = arith.constant 7 : index
    %332 = memref.load %arg2[%c17_168, %c7_169] : memref<24x8xf32, #tpu.memory_space<smem>>
    %333 = vector.broadcast %332 : f32 to vector<8x32xf32>
    %334 = arith.mulf %333, %15 : vector<8x32xf32>
    %335 = arith.addf %331, %334 : vector<8x32xf32>
    %cst_170 = arith.constant 0.000000e+00 : f32
    %336 = vector.broadcast %cst_170 : f32 to vector<8x2xf32>
    %337 = tpu.concatenate %336, %335 in 1 : vector<8x2xf32>, vector<8x32xf32> -> vector<8x34xf32>
    %338 = arith.addf %304, %337 : vector<8x34xf32>
    %339 = vector.extract_strided_slice %338 {offsets = [0, 0], sizes = [8, 33], strides = [1, 1]} : vector<8x34xf32> to vector<8x33xf32>
    %c1_171 = arith.constant 1 : index
    %340 = memref.load %arg3[%c1_171] : memref<8xf32, #tpu.memory_space<smem>>
    %341 = vector.broadcast %340 : f32 to vector<8x33xf32>
    %342 = arith.addf %339, %341 : vector<8x33xf32>
    %c5_172 = arith.constant 5 : index
    %c0_173 = arith.constant 0 : index
    %343 = memref.load %arg2[%c5_172, %c0_173] : memref<24x8xf32, #tpu.memory_space<smem>>
    %344 = vector.broadcast %343 : f32 to vector<8x32xf32>
    %345 = arith.mulf %344, %1 : vector<8x32xf32>
    %c5_174 = arith.constant 5 : index
    %c1_175 = arith.constant 1 : index
    %346 = memref.load %arg2[%c5_174, %c1_175] : memref<24x8xf32, #tpu.memory_space<smem>>
    %347 = vector.broadcast %346 : f32 to vector<8x32xf32>
    %348 = arith.mulf %347, %3 : vector<8x32xf32>
    %349 = arith.addf %345, %348 : vector<8x32xf32>
    %c5_176 = arith.constant 5 : index
    %c2_177 = arith.constant 2 : index
    %350 = memref.load %arg2[%c5_176, %c2_177] : memref<24x8xf32, #tpu.memory_space<smem>>
    %351 = vector.broadcast %350 : f32 to vector<8x32xf32>
    %352 = arith.mulf %351, %5 : vector<8x32xf32>
    %353 = arith.addf %349, %352 : vector<8x32xf32>
    %c5_178 = arith.constant 5 : index
    %c3_179 = arith.constant 3 : index
    %354 = memref.load %arg2[%c5_178, %c3_179] : memref<24x8xf32, #tpu.memory_space<smem>>
    %355 = vector.broadcast %354 : f32 to vector<8x32xf32>
    %356 = arith.mulf %355, %7 : vector<8x32xf32>
    %357 = arith.addf %353, %356 : vector<8x32xf32>
    %c5_180 = arith.constant 5 : index
    %c4_181 = arith.constant 4 : index
    %358 = memref.load %arg2[%c5_180, %c4_181] : memref<24x8xf32, #tpu.memory_space<smem>>
    %359 = vector.broadcast %358 : f32 to vector<8x32xf32>
    %360 = arith.mulf %359, %9 : vector<8x32xf32>
    %361 = arith.addf %357, %360 : vector<8x32xf32>
    %c5_182 = arith.constant 5 : index
    %c5_183 = arith.constant 5 : index
    %362 = memref.load %arg2[%c5_182, %c5_183] : memref<24x8xf32, #tpu.memory_space<smem>>
    %363 = vector.broadcast %362 : f32 to vector<8x32xf32>
    %364 = arith.mulf %363, %11 : vector<8x32xf32>
    %365 = arith.addf %361, %364 : vector<8x32xf32>
    %c5_184 = arith.constant 5 : index
    %c6_185 = arith.constant 6 : index
    %366 = memref.load %arg2[%c5_184, %c6_185] : memref<24x8xf32, #tpu.memory_space<smem>>
    %367 = vector.broadcast %366 : f32 to vector<8x32xf32>
    %368 = arith.mulf %367, %13 : vector<8x32xf32>
    %369 = arith.addf %365, %368 : vector<8x32xf32>
    %c5_186 = arith.constant 5 : index
    %c7_187 = arith.constant 7 : index
    %370 = memref.load %arg2[%c5_186, %c7_187] : memref<24x8xf32, #tpu.memory_space<smem>>
    %371 = vector.broadcast %370 : f32 to vector<8x32xf32>
    %372 = arith.mulf %371, %15 : vector<8x32xf32>
    %373 = arith.addf %369, %372 : vector<8x32xf32>
    %cst_188 = arith.constant 0.000000e+00 : f32
    %374 = vector.broadcast %cst_188 : f32 to vector<8x2xf32>
    %375 = tpu.concatenate %373, %374 in 1 : vector<8x32xf32>, vector<8x2xf32> -> vector<8x34xf32>
    %c13 = arith.constant 13 : index
    %c0_189 = arith.constant 0 : index
    %376 = memref.load %arg2[%c13, %c0_189] : memref<24x8xf32, #tpu.memory_space<smem>>
    %377 = vector.broadcast %376 : f32 to vector<8x32xf32>
    %378 = arith.mulf %377, %1 : vector<8x32xf32>
    %c13_190 = arith.constant 13 : index
    %c1_191 = arith.constant 1 : index
    %379 = memref.load %arg2[%c13_190, %c1_191] : memref<24x8xf32, #tpu.memory_space<smem>>
    %380 = vector.broadcast %379 : f32 to vector<8x32xf32>
    %381 = arith.mulf %380, %3 : vector<8x32xf32>
    %382 = arith.addf %378, %381 : vector<8x32xf32>
    %c13_192 = arith.constant 13 : index
    %c2_193 = arith.constant 2 : index
    %383 = memref.load %arg2[%c13_192, %c2_193] : memref<24x8xf32, #tpu.memory_space<smem>>
    %384 = vector.broadcast %383 : f32 to vector<8x32xf32>
    %385 = arith.mulf %384, %5 : vector<8x32xf32>
    %386 = arith.addf %382, %385 : vector<8x32xf32>
    %c13_194 = arith.constant 13 : index
    %c3_195 = arith.constant 3 : index
    %387 = memref.load %arg2[%c13_194, %c3_195] : memref<24x8xf32, #tpu.memory_space<smem>>
    %388 = vector.broadcast %387 : f32 to vector<8x32xf32>
    %389 = arith.mulf %388, %7 : vector<8x32xf32>
    %390 = arith.addf %386, %389 : vector<8x32xf32>
    %c13_196 = arith.constant 13 : index
    %c4_197 = arith.constant 4 : index
    %391 = memref.load %arg2[%c13_196, %c4_197] : memref<24x8xf32, #tpu.memory_space<smem>>
    %392 = vector.broadcast %391 : f32 to vector<8x32xf32>
    %393 = arith.mulf %392, %9 : vector<8x32xf32>
    %394 = arith.addf %390, %393 : vector<8x32xf32>
    %c13_198 = arith.constant 13 : index
    %c5_199 = arith.constant 5 : index
    %395 = memref.load %arg2[%c13_198, %c5_199] : memref<24x8xf32, #tpu.memory_space<smem>>
    %396 = vector.broadcast %395 : f32 to vector<8x32xf32>
    %397 = arith.mulf %396, %11 : vector<8x32xf32>
    %398 = arith.addf %394, %397 : vector<8x32xf32>
    %c13_200 = arith.constant 13 : index
    %c6_201 = arith.constant 6 : index
    %399 = memref.load %arg2[%c13_200, %c6_201] : memref<24x8xf32, #tpu.memory_space<smem>>
    %400 = vector.broadcast %399 : f32 to vector<8x32xf32>
    %401 = arith.mulf %400, %13 : vector<8x32xf32>
    %402 = arith.addf %398, %401 : vector<8x32xf32>
    %c13_202 = arith.constant 13 : index
    %c7_203 = arith.constant 7 : index
    %403 = memref.load %arg2[%c13_202, %c7_203] : memref<24x8xf32, #tpu.memory_space<smem>>
    %404 = vector.broadcast %403 : f32 to vector<8x32xf32>
    %405 = arith.mulf %404, %15 : vector<8x32xf32>
    %406 = arith.addf %402, %405 : vector<8x32xf32>
    %cst_204 = arith.constant 0.000000e+00 : f32
    %407 = vector.broadcast %cst_204 : f32 to vector<8x1xf32>
    %cst_205 = arith.constant 0.000000e+00 : f32
    %408 = vector.broadcast %cst_205 : f32 to vector<8x1xf32>
    %409 = tpu.concatenate %407, %406, %408 in 1 : vector<8x1xf32>, vector<8x32xf32>, vector<8x1xf32> -> vector<8x34xf32>
    %410 = arith.addf %375, %409 : vector<8x34xf32>
    %c21 = arith.constant 21 : index
    %c0_206 = arith.constant 0 : index
    %411 = memref.load %arg2[%c21, %c0_206] : memref<24x8xf32, #tpu.memory_space<smem>>
    %412 = vector.broadcast %411 : f32 to vector<8x32xf32>
    %413 = arith.mulf %412, %1 : vector<8x32xf32>
    %c21_207 = arith.constant 21 : index
    %c1_208 = arith.constant 1 : index
    %414 = memref.load %arg2[%c21_207, %c1_208] : memref<24x8xf32, #tpu.memory_space<smem>>
    %415 = vector.broadcast %414 : f32 to vector<8x32xf32>
    %416 = arith.mulf %415, %3 : vector<8x32xf32>
    %417 = arith.addf %413, %416 : vector<8x32xf32>
    %c21_209 = arith.constant 21 : index
    %c2_210 = arith.constant 2 : index
    %418 = memref.load %arg2[%c21_209, %c2_210] : memref<24x8xf32, #tpu.memory_space<smem>>
    %419 = vector.broadcast %418 : f32 to vector<8x32xf32>
    %420 = arith.mulf %419, %5 : vector<8x32xf32>
    %421 = arith.addf %417, %420 : vector<8x32xf32>
    %c21_211 = arith.constant 21 : index
    %c3_212 = arith.constant 3 : index
    %422 = memref.load %arg2[%c21_211, %c3_212] : memref<24x8xf32, #tpu.memory_space<smem>>
    %423 = vector.broadcast %422 : f32 to vector<8x32xf32>
    %424 = arith.mulf %423, %7 : vector<8x32xf32>
    %425 = arith.addf %421, %424 : vector<8x32xf32>
    %c21_213 = arith.constant 21 : index
    %c4_214 = arith.constant 4 : index
    %426 = memref.load %arg2[%c21_213, %c4_214] : memref<24x8xf32, #tpu.memory_space<smem>>
    %427 = vector.broadcast %426 : f32 to vector<8x32xf32>
    %428 = arith.mulf %427, %9 : vector<8x32xf32>
    %429 = arith.addf %425, %428 : vector<8x32xf32>
    %c21_215 = arith.constant 21 : index
    %c5_216 = arith.constant 5 : index
    %430 = memref.load %arg2[%c21_215, %c5_216] : memref<24x8xf32, #tpu.memory_space<smem>>
    %431 = vector.broadcast %430 : f32 to vector<8x32xf32>
    %432 = arith.mulf %431, %11 : vector<8x32xf32>
    %433 = arith.addf %429, %432 : vector<8x32xf32>
    %c21_217 = arith.constant 21 : index
    %c6_218 = arith.constant 6 : index
    %434 = memref.load %arg2[%c21_217, %c6_218] : memref<24x8xf32, #tpu.memory_space<smem>>
    %435 = vector.broadcast %434 : f32 to vector<8x32xf32>
    %436 = arith.mulf %435, %13 : vector<8x32xf32>
    %437 = arith.addf %433, %436 : vector<8x32xf32>
    %c21_219 = arith.constant 21 : index
    %c7_220 = arith.constant 7 : index
    %438 = memref.load %arg2[%c21_219, %c7_220] : memref<24x8xf32, #tpu.memory_space<smem>>
    %439 = vector.broadcast %438 : f32 to vector<8x32xf32>
    %440 = arith.mulf %439, %15 : vector<8x32xf32>
    %441 = arith.addf %437, %440 : vector<8x32xf32>
    %cst_221 = arith.constant 0.000000e+00 : f32
    %442 = vector.broadcast %cst_221 : f32 to vector<8x2xf32>
    %443 = tpu.concatenate %442, %441 in 1 : vector<8x2xf32>, vector<8x32xf32> -> vector<8x34xf32>
    %444 = arith.addf %410, %443 : vector<8x34xf32>
    %445 = vector.extract_strided_slice %444 {offsets = [0, 0], sizes = [8, 33], strides = [1, 1]} : vector<8x34xf32> to vector<8x33xf32>
    %c5_222 = arith.constant 5 : index
    %446 = memref.load %arg3[%c5_222] : memref<8xf32, #tpu.memory_space<smem>>
    %447 = vector.broadcast %446 : f32 to vector<8x33xf32>
    %448 = arith.addf %445, %447 : vector<8x33xf32>
    %449 = arith.negf %448 : vector<8x33xf32>
    %450 = math.exp %449 : vector<8x33xf32>
    %cst_223 = arith.constant 1.000000e+00 : f32
    %451 = vector.broadcast %cst_223 : f32 to vector<8x33xf32>
    %452 = arith.addf %451, %450 : vector<8x33xf32>
    %453 = arith.divf %451, %452 : vector<8x33xf32>
    %454 = arith.mulf %342, %453 : vector<8x33xf32>
    %c1_224 = arith.constant 1 : index
    %c0_225 = arith.constant 0 : index
    %c0_226 = arith.constant 0 : index
    %455 = vector.load %arg4[%c1_224, %c0_225, %c0_226] : memref<4x8x33xf32, #tpu.memory_space<vmem>>, vector<1x8x33xf32>
    %456 = vector.shape_cast %455 : vector<1x8x33xf32> to vector<8x33xf32>
    %457 = vector.shape_cast %454 : vector<8x33xf32> to vector<1x8x33xf32>
    tpu.vector_store %arg4[%c1_224, %c0_225, %c0_226], %457 {strides = array<i32>} : memref<4x8x33xf32, #tpu.memory_space<vmem>>, vector<1x8x33xf32>,
    %c2_227 = arith.constant 2 : index
    %c0_228 = arith.constant 0 : index
    %458 = memref.load %arg2[%c2_227, %c0_228] : memref<24x8xf32, #tpu.memory_space<smem>>
    %459 = vector.broadcast %458 : f32 to vector<8x32xf32>
    %460 = arith.mulf %459, %1 : vector<8x32xf32>
    %c2_229 = arith.constant 2 : index
    %c1_230 = arith.constant 1 : index
    %461 = memref.load %arg2[%c2_229, %c1_230] : memref<24x8xf32, #tpu.memory_space<smem>>
    %462 = vector.broadcast %461 : f32 to vector<8x32xf32>
    %463 = arith.mulf %462, %3 : vector<8x32xf32>
    %464 = arith.addf %460, %463 : vector<8x32xf32>
    %c2_231 = arith.constant 2 : index
    %c2_232 = arith.constant 2 : index
    %465 = memref.load %arg2[%c2_231, %c2_232] : memref<24x8xf32, #tpu.memory_space<smem>>
    %466 = vector.broadcast %465 : f32 to vector<8x32xf32>
    %467 = arith.mulf %466, %5 : vector<8x32xf32>
    %468 = arith.addf %464, %467 : vector<8x32xf32>
    %c2_233 = arith.constant 2 : index
    %c3_234 = arith.constant 3 : index
    %469 = memref.load %arg2[%c2_233, %c3_234] : memref<24x8xf32, #tpu.memory_space<smem>>
    %470 = vector.broadcast %469 : f32 to vector<8x32xf32>
    %471 = arith.mulf %470, %7 : vector<8x32xf32>
    %472 = arith.addf %468, %471 : vector<8x32xf32>
    %c2_235 = arith.constant 2 : index
    %c4_236 = arith.constant 4 : index
    %473 = memref.load %arg2[%c2_235, %c4_236] : memref<24x8xf32, #tpu.memory_space<smem>>
    %474 = vector.broadcast %473 : f32 to vector<8x32xf32>
    %475 = arith.mulf %474, %9 : vector<8x32xf32>
    %476 = arith.addf %472, %475 : vector<8x32xf32>
    %c2_237 = arith.constant 2 : index
    %c5_238 = arith.constant 5 : index
    %477 = memref.load %arg2[%c2_237, %c5_238] : memref<24x8xf32, #tpu.memory_space<smem>>
    %478 = vector.broadcast %477 : f32 to vector<8x32xf32>
    %479 = arith.mulf %478, %11 : vector<8x32xf32>
    %480 = arith.addf %476, %479 : vector<8x32xf32>
    %c2_239 = arith.constant 2 : index
    %c6_240 = arith.constant 6 : index
    %481 = memref.load %arg2[%c2_239, %c6_240] : memref<24x8xf32, #tpu.memory_space<smem>>
    %482 = vector.broadcast %481 : f32 to vector<8x32xf32>
    %483 = arith.mulf %482, %13 : vector<8x32xf32>
    %484 = arith.addf %480, %483 : vector<8x32xf32>
    %c2_241 = arith.constant 2 : index
    %c7_242 = arith.constant 7 : index
    %485 = memref.load %arg2[%c2_241, %c7_242] : memref<24x8xf32, #tpu.memory_space<smem>>
    %486 = vector.broadcast %485 : f32 to vector<8x32xf32>
    %487 = arith.mulf %486, %15 : vector<8x32xf32>
    %488 = arith.addf %484, %487 : vector<8x32xf32>
    %cst_243 = arith.constant 0.000000e+00 : f32
    %489 = vector.broadcast %cst_243 : f32 to vector<8x2xf32>
    %490 = tpu.concatenate %488, %489 in 1 : vector<8x32xf32>, vector<8x2xf32> -> vector<8x34xf32>
    %c10 = arith.constant 10 : index
    %c0_244 = arith.constant 0 : index
    %491 = memref.load %arg2[%c10, %c0_244] : memref<24x8xf32, #tpu.memory_space<smem>>
    %492 = vector.broadcast %491 : f32 to vector<8x32xf32>
    %493 = arith.mulf %492, %1 : vector<8x32xf32>
    %c10_245 = arith.constant 10 : index
    %c1_246 = arith.constant 1 : index
    %494 = memref.load %arg2[%c10_245, %c1_246] : memref<24x8xf32, #tpu.memory_space<smem>>
    %495 = vector.broadcast %494 : f32 to vector<8x32xf32>
    %496 = arith.mulf %495, %3 : vector<8x32xf32>
    %497 = arith.addf %493, %496 : vector<8x32xf32>
    %c10_247 = arith.constant 10 : index
    %c2_248 = arith.constant 2 : index
    %498 = memref.load %arg2[%c10_247, %c2_248] : memref<24x8xf32, #tpu.memory_space<smem>>
    %499 = vector.broadcast %498 : f32 to vector<8x32xf32>
    %500 = arith.mulf %499, %5 : vector<8x32xf32>
    %501 = arith.addf %497, %500 : vector<8x32xf32>
    %c10_249 = arith.constant 10 : index
    %c3_250 = arith.constant 3 : index
    %502 = memref.load %arg2[%c10_249, %c3_250] : memref<24x8xf32, #tpu.memory_space<smem>>
    %503 = vector.broadcast %502 : f32 to vector<8x32xf32>
    %504 = arith.mulf %503, %7 : vector<8x32xf32>
    %505 = arith.addf %501, %504 : vector<8x32xf32>
    %c10_251 = arith.constant 10 : index
    %c4_252 = arith.constant 4 : index
    %506 = memref.load %arg2[%c10_251, %c4_252] : memref<24x8xf32, #tpu.memory_space<smem>>
    %507 = vector.broadcast %506 : f32 to vector<8x32xf32>
    %508 = arith.mulf %507, %9 : vector<8x32xf32>
    %509 = arith.addf %505, %508 : vector<8x32xf32>
    %c10_253 = arith.constant 10 : index
    %c5_254 = arith.constant 5 : index
    %510 = memref.load %arg2[%c10_253, %c5_254] : memref<24x8xf32, #tpu.memory_space<smem>>
    %511 = vector.broadcast %510 : f32 to vector<8x32xf32>
    %512 = arith.mulf %511, %11 : vector<8x32xf32>
    %513 = arith.addf %509, %512 : vector<8x32xf32>
    %c10_255 = arith.constant 10 : index
    %c6_256 = arith.constant 6 : index
    %514 = memref.load %arg2[%c10_255, %c6_256] : memref<24x8xf32, #tpu.memory_space<smem>>
    %515 = vector.broadcast %514 : f32 to vector<8x32xf32>
    %516 = arith.mulf %515, %13 : vector<8x32xf32>
    %517 = arith.addf %513, %516 : vector<8x32xf32>
    %c10_257 = arith.constant 10 : index
    %c7_258 = arith.constant 7 : index
    %518 = memref.load %arg2[%c10_257, %c7_258] : memref<24x8xf32, #tpu.memory_space<smem>>
    %519 = vector.broadcast %518 : f32 to vector<8x32xf32>
    %520 = arith.mulf %519, %15 : vector<8x32xf32>
    %521 = arith.addf %517, %520 : vector<8x32xf32>
    %cst_259 = arith.constant 0.000000e+00 : f32
    %522 = vector.broadcast %cst_259 : f32 to vector<8x1xf32>
    %cst_260 = arith.constant 0.000000e+00 : f32
    %523 = vector.broadcast %cst_260 : f32 to vector<8x1xf32>
    %524 = tpu.concatenate %522, %521, %523 in 1 : vector<8x1xf32>, vector<8x32xf32>, vector<8x1xf32> -> vector<8x34xf32>
    %525 = arith.addf %490, %524 : vector<8x34xf32>
    %c18 = arith.constant 18 : index
    %c0_261 = arith.constant 0 : index
    %526 = memref.load %arg2[%c18, %c0_261] : memref<24x8xf32, #tpu.memory_space<smem>>
    %527 = vector.broadcast %526 : f32 to vector<8x32xf32>
    %528 = arith.mulf %527, %1 : vector<8x32xf32>
    %c18_262 = arith.constant 18 : index
    %c1_263 = arith.constant 1 : index
    %529 = memref.load %arg2[%c18_262, %c1_263] : memref<24x8xf32, #tpu.memory_space<smem>>
    %530 = vector.broadcast %529 : f32 to vector<8x32xf32>
    %531 = arith.mulf %530, %3 : vector<8x32xf32>
    %532 = arith.addf %528, %531 : vector<8x32xf32>
    %c18_264 = arith.constant 18 : index
    %c2_265 = arith.constant 2 : index
    %533 = memref.load %arg2[%c18_264, %c2_265] : memref<24x8xf32, #tpu.memory_space<smem>>
    %534 = vector.broadcast %533 : f32 to vector<8x32xf32>
    %535 = arith.mulf %534, %5 : vector<8x32xf32>
    %536 = arith.addf %532, %535 : vector<8x32xf32>
    %c18_266 = arith.constant 18 : index
    %c3_267 = arith.constant 3 : index
    %537 = memref.load %arg2[%c18_266, %c3_267] : memref<24x8xf32, #tpu.memory_space<smem>>
    %538 = vector.broadcast %537 : f32 to vector<8x32xf32>
    %539 = arith.mulf %538, %7 : vector<8x32xf32>
    %540 = arith.addf %536, %539 : vector<8x32xf32>
    %c18_268 = arith.constant 18 : index
    %c4_269 = arith.constant 4 : index
    %541 = memref.load %arg2[%c18_268, %c4_269] : memref<24x8xf32, #tpu.memory_space<smem>>
    %542 = vector.broadcast %541 : f32 to vector<8x32xf32>
    %543 = arith.mulf %542, %9 : vector<8x32xf32>
    %544 = arith.addf %540, %543 : vector<8x32xf32>
    %c18_270 = arith.constant 18 : index
    %c5_271 = arith.constant 5 : index
    %545 = memref.load %arg2[%c18_270, %c5_271] : memref<24x8xf32, #tpu.memory_space<smem>>
    %546 = vector.broadcast %545 : f32 to vector<8x32xf32>
    %547 = arith.mulf %546, %11 : vector<8x32xf32>
    %548 = arith.addf %544, %547 : vector<8x32xf32>
    %c18_272 = arith.constant 18 : index
    %c6_273 = arith.constant 6 : index
    %549 = memref.load %arg2[%c18_272, %c6_273] : memref<24x8xf32, #tpu.memory_space<smem>>
    %550 = vector.broadcast %549 : f32 to vector<8x32xf32>
    %551 = arith.mulf %550, %13 : vector<8x32xf32>
    %552 = arith.addf %548, %551 : vector<8x32xf32>
    %c18_274 = arith.constant 18 : index
    %c7_275 = arith.constant 7 : index
    %553 = memref.load %arg2[%c18_274, %c7_275] : memref<24x8xf32, #tpu.memory_space<smem>>
    %554 = vector.broadcast %553 : f32 to vector<8x32xf32>
    %555 = arith.mulf %554, %15 : vector<8x32xf32>
    %556 = arith.addf %552, %555 : vector<8x32xf32>
    %cst_276 = arith.constant 0.000000e+00 : f32
    %557 = vector.broadcast %cst_276 : f32 to vector<8x2xf32>
    %558 = tpu.concatenate %557, %556 in 1 : vector<8x2xf32>, vector<8x32xf32> -> vector<8x34xf32>
    %559 = arith.addf %525, %558 : vector<8x34xf32>
    %560 = vector.extract_strided_slice %559 {offsets = [0, 0], sizes = [8, 33], strides = [1, 1]} : vector<8x34xf32> to vector<8x33xf32>
    %c2_277 = arith.constant 2 : index
    %561 = memref.load %arg3[%c2_277] : memref<8xf32, #tpu.memory_space<smem>>
    %562 = vector.broadcast %561 : f32 to vector<8x33xf32>
    %563 = arith.addf %560, %562 : vector<8x33xf32>
    %c6_278 = arith.constant 6 : index
    %c0_279 = arith.constant 0 : index
    %564 = memref.load %arg2[%c6_278, %c0_279] : memref<24x8xf32, #tpu.memory_space<smem>>
    %565 = vector.broadcast %564 : f32 to vector<8x32xf32>
    %566 = arith.mulf %565, %1 : vector<8x32xf32>
    %c6_280 = arith.constant 6 : index
    %c1_281 = arith.constant 1 : index
    %567 = memref.load %arg2[%c6_280, %c1_281] : memref<24x8xf32, #tpu.memory_space<smem>>
    %568 = vector.broadcast %567 : f32 to vector<8x32xf32>
    %569 = arith.mulf %568, %3 : vector<8x32xf32>
    %570 = arith.addf %566, %569 : vector<8x32xf32>
    %c6_282 = arith.constant 6 : index
    %c2_283 = arith.constant 2 : index
    %571 = memref.load %arg2[%c6_282, %c2_283] : memref<24x8xf32, #tpu.memory_space<smem>>
    %572 = vector.broadcast %571 : f32 to vector<8x32xf32>
    %573 = arith.mulf %572, %5 : vector<8x32xf32>
    %574 = arith.addf %570, %573 : vector<8x32xf32>
    %c6_284 = arith.constant 6 : index
    %c3_285 = arith.constant 3 : index
    %575 = memref.load %arg2[%c6_284, %c3_285] : memref<24x8xf32, #tpu.memory_space<smem>>
    %576 = vector.broadcast %575 : f32 to vector<8x32xf32>
    %577 = arith.mulf %576, %7 : vector<8x32xf32>
    %578 = arith.addf %574, %577 : vector<8x32xf32>
    %c6_286 = arith.constant 6 : index
    %c4_287 = arith.constant 4 : index
    %579 = memref.load %arg2[%c6_286, %c4_287] : memref<24x8xf32, #tpu.memory_space<smem>>
    %580 = vector.broadcast %579 : f32 to vector<8x32xf32>
    %581 = arith.mulf %580, %9 : vector<8x32xf32>
    %582 = arith.addf %578, %581 : vector<8x32xf32>
    %c6_288 = arith.constant 6 : index
    %c5_289 = arith.constant 5 : index
    %583 = memref.load %arg2[%c6_288, %c5_289] : memref<24x8xf32, #tpu.memory_space<smem>>
    %584 = vector.broadcast %583 : f32 to vector<8x32xf32>
    %585 = arith.mulf %584, %11 : vector<8x32xf32>
    %586 = arith.addf %582, %585 : vector<8x32xf32>
    %c6_290 = arith.constant 6 : index
    %c6_291 = arith.constant 6 : index
    %587 = memref.load %arg2[%c6_290, %c6_291] : memref<24x8xf32, #tpu.memory_space<smem>>
    %588 = vector.broadcast %587 : f32 to vector<8x32xf32>
    %589 = arith.mulf %588, %13 : vector<8x32xf32>
    %590 = arith.addf %586, %589 : vector<8x32xf32>
    %c6_292 = arith.constant 6 : index
    %c7_293 = arith.constant 7 : index
    %591 = memref.load %arg2[%c6_292, %c7_293] : memref<24x8xf32, #tpu.memory_space<smem>>
    %592 = vector.broadcast %591 : f32 to vector<8x32xf32>
    %593 = arith.mulf %592, %15 : vector<8x32xf32>
    %594 = arith.addf %590, %593 : vector<8x32xf32>
    %cst_294 = arith.constant 0.000000e+00 : f32
    %595 = vector.broadcast %cst_294 : f32 to vector<8x2xf32>
    %596 = tpu.concatenate %594, %595 in 1 : vector<8x32xf32>, vector<8x2xf32> -> vector<8x34xf32>
    %c14 = arith.constant 14 : index
    %c0_295 = arith.constant 0 : index
    %597 = memref.load %arg2[%c14, %c0_295] : memref<24x8xf32, #tpu.memory_space<smem>>
    %598 = vector.broadcast %597 : f32 to vector<8x32xf32>
    %599 = arith.mulf %598, %1 : vector<8x32xf32>
    %c14_296 = arith.constant 14 : index
    %c1_297 = arith.constant 1 : index
    %600 = memref.load %arg2[%c14_296, %c1_297] : memref<24x8xf32, #tpu.memory_space<smem>>
    %601 = vector.broadcast %600 : f32 to vector<8x32xf32>
    %602 = arith.mulf %601, %3 : vector<8x32xf32>
    %603 = arith.addf %599, %602 : vector<8x32xf32>
    %c14_298 = arith.constant 14 : index
    %c2_299 = arith.constant 2 : index
    %604 = memref.load %arg2[%c14_298, %c2_299] : memref<24x8xf32, #tpu.memory_space<smem>>
    %605 = vector.broadcast %604 : f32 to vector<8x32xf32>
    %606 = arith.mulf %605, %5 : vector<8x32xf32>
    %607 = arith.addf %603, %606 : vector<8x32xf32>
    %c14_300 = arith.constant 14 : index
    %c3_301 = arith.constant 3 : index
    %608 = memref.load %arg2[%c14_300, %c3_301] : memref<24x8xf32, #tpu.memory_space<smem>>
    %609 = vector.broadcast %608 : f32 to vector<8x32xf32>
    %610 = arith.mulf %609, %7 : vector<8x32xf32>
    %611 = arith.addf %607, %610 : vector<8x32xf32>
    %c14_302 = arith.constant 14 : index
    %c4_303 = arith.constant 4 : index
    %612 = memref.load %arg2[%c14_302, %c4_303] : memref<24x8xf32, #tpu.memory_space<smem>>
    %613 = vector.broadcast %612 : f32 to vector<8x32xf32>
    %614 = arith.mulf %613, %9 : vector<8x32xf32>
    %615 = arith.addf %611, %614 : vector<8x32xf32>
    %c14_304 = arith.constant 14 : index
    %c5_305 = arith.constant 5 : index
    %616 = memref.load %arg2[%c14_304, %c5_305] : memref<24x8xf32, #tpu.memory_space<smem>>
    %617 = vector.broadcast %616 : f32 to vector<8x32xf32>
    %618 = arith.mulf %617, %11 : vector<8x32xf32>
    %619 = arith.addf %615, %618 : vector<8x32xf32>
    %c14_306 = arith.constant 14 : index
    %c6_307 = arith.constant 6 : index
    %620 = memref.load %arg2[%c14_306, %c6_307] : memref<24x8xf32, #tpu.memory_space<smem>>
    %621 = vector.broadcast %620 : f32 to vector<8x32xf32>
    %622 = arith.mulf %621, %13 : vector<8x32xf32>
    %623 = arith.addf %619, %622 : vector<8x32xf32>
    %c14_308 = arith.constant 14 : index
    %c7_309 = arith.constant 7 : index
    %624 = memref.load %arg2[%c14_308, %c7_309] : memref<24x8xf32, #tpu.memory_space<smem>>
    %625 = vector.broadcast %624 : f32 to vector<8x32xf32>
    %626 = arith.mulf %625, %15 : vector<8x32xf32>
    %627 = arith.addf %623, %626 : vector<8x32xf32>
    %cst_310 = arith.constant 0.000000e+00 : f32
    %628 = vector.broadcast %cst_310 : f32 to vector<8x1xf32>
    %cst_311 = arith.constant 0.000000e+00 : f32
    %629 = vector.broadcast %cst_311 : f32 to vector<8x1xf32>
    %630 = tpu.concatenate %628, %627, %629 in 1 : vector<8x1xf32>, vector<8x32xf32>, vector<8x1xf32> -> vector<8x34xf32>
    %631 = arith.addf %596, %630 : vector<8x34xf32>
    %c22 = arith.constant 22 : index
    %c0_312 = arith.constant 0 : index
    %632 = memref.load %arg2[%c22, %c0_312] : memref<24x8xf32, #tpu.memory_space<smem>>
    %633 = vector.broadcast %632 : f32 to vector<8x32xf32>
    %634 = arith.mulf %633, %1 : vector<8x32xf32>
    %c22_313 = arith.constant 22 : index
    %c1_314 = arith.constant 1 : index
    %635 = memref.load %arg2[%c22_313, %c1_314] : memref<24x8xf32, #tpu.memory_space<smem>>
    %636 = vector.broadcast %635 : f32 to vector<8x32xf32>
    %637 = arith.mulf %636, %3 : vector<8x32xf32>
    %638 = arith.addf %634, %637 : vector<8x32xf32>
    %c22_315 = arith.constant 22 : index
    %c2_316 = arith.constant 2 : index
    %639 = memref.load %arg2[%c22_315, %c2_316] : memref<24x8xf32, #tpu.memory_space<smem>>
    %640 = vector.broadcast %639 : f32 to vector<8x32xf32>
    %641 = arith.mulf %640, %5 : vector<8x32xf32>
    %642 = arith.addf %638, %641 : vector<8x32xf32>
    %c22_317 = arith.constant 22 : index
    %c3_318 = arith.constant 3 : index
    %643 = memref.load %arg2[%c22_317, %c3_318] : memref<24x8xf32, #tpu.memory_space<smem>>
    %644 = vector.broadcast %643 : f32 to vector<8x32xf32>
    %645 = arith.mulf %644, %7 : vector<8x32xf32>
    %646 = arith.addf %642, %645 : vector<8x32xf32>
    %c22_319 = arith.constant 22 : index
    %c4_320 = arith.constant 4 : index
    %647 = memref.load %arg2[%c22_319, %c4_320] : memref<24x8xf32, #tpu.memory_space<smem>>
    %648 = vector.broadcast %647 : f32 to vector<8x32xf32>
    %649 = arith.mulf %648, %9 : vector<8x32xf32>
    %650 = arith.addf %646, %649 : vector<8x32xf32>
    %c22_321 = arith.constant 22 : index
    %c5_322 = arith.constant 5 : index
    %651 = memref.load %arg2[%c22_321, %c5_322] : memref<24x8xf32, #tpu.memory_space<smem>>
    %652 = vector.broadcast %651 : f32 to vector<8x32xf32>
    %653 = arith.mulf %652, %11 : vector<8x32xf32>
    %654 = arith.addf %650, %653 : vector<8x32xf32>
    %c22_323 = arith.constant 22 : index
    %c6_324 = arith.constant 6 : index
    %655 = memref.load %arg2[%c22_323, %c6_324] : memref<24x8xf32, #tpu.memory_space<smem>>
    %656 = vector.broadcast %655 : f32 to vector<8x32xf32>
    %657 = arith.mulf %656, %13 : vector<8x32xf32>
    %658 = arith.addf %654, %657 : vector<8x32xf32>
    %c22_325 = arith.constant 22 : index
    %c7_326 = arith.constant 7 : index
    %659 = memref.load %arg2[%c22_325, %c7_326] : memref<24x8xf32, #tpu.memory_space<smem>>
    %660 = vector.broadcast %659 : f32 to vector<8x32xf32>
    %661 = arith.mulf %660, %15 : vector<8x32xf32>
    %662 = arith.addf %658, %661 : vector<8x32xf32>
    %cst_327 = arith.constant 0.000000e+00 : f32
    %663 = vector.broadcast %cst_327 : f32 to vector<8x2xf32>
    %664 = tpu.concatenate %663, %662 in 1 : vector<8x2xf32>, vector<8x32xf32> -> vector<8x34xf32>
    %665 = arith.addf %631, %664 : vector<8x34xf32>
    %666 = vector.extract_strided_slice %665 {offsets = [0, 0], sizes = [8, 33], strides = [1, 1]} : vector<8x34xf32> to vector<8x33xf32>
    %c6_328 = arith.constant 6 : index
    %667 = memref.load %arg3[%c6_328] : memref<8xf32, #tpu.memory_space<smem>>
    %668 = vector.broadcast %667 : f32 to vector<8x33xf32>
    %669 = arith.addf %666, %668 : vector<8x33xf32>
    %670 = arith.negf %669 : vector<8x33xf32>
    %671 = math.exp %670 : vector<8x33xf32>
    %cst_329 = arith.constant 1.000000e+00 : f32
    %672 = vector.broadcast %cst_329 : f32 to vector<8x33xf32>
    %673 = arith.addf %672, %671 : vector<8x33xf32>
    %674 = arith.divf %672, %673 : vector<8x33xf32>
    %675 = arith.mulf %563, %674 : vector<8x33xf32>
    %c2_330 = arith.constant 2 : index
    %c0_331 = arith.constant 0 : index
    %c0_332 = arith.constant 0 : index
    %676 = vector.load %arg4[%c2_330, %c0_331, %c0_332] : memref<4x8x33xf32, #tpu.memory_space<vmem>>, vector<1x8x33xf32>
    %677 = vector.shape_cast %676 : vector<1x8x33xf32> to vector<8x33xf32>
    %678 = vector.shape_cast %675 : vector<8x33xf32> to vector<1x8x33xf32>
    tpu.vector_store %arg4[%c2_330, %c0_331, %c0_332], %678 {strides = array<i32>} : memref<4x8x33xf32, #tpu.memory_space<vmem>>, vector<1x8x33xf32>,
    %c3_333 = arith.constant 3 : index
    %c0_334 = arith.constant 0 : index
    %679 = memref.load %arg2[%c3_333, %c0_334] : memref<24x8xf32, #tpu.memory_space<smem>>
    %680 = vector.broadcast %679 : f32 to vector<8x32xf32>
    %681 = arith.mulf %680, %1 : vector<8x32xf32>
    %c3_335 = arith.constant 3 : index
    %c1_336 = arith.constant 1 : index
    %682 = memref.load %arg2[%c3_335, %c1_336] : memref<24x8xf32, #tpu.memory_space<smem>>
    %683 = vector.broadcast %682 : f32 to vector<8x32xf32>
    %684 = arith.mulf %683, %3 : vector<8x32xf32>
    %685 = arith.addf %681, %684 : vector<8x32xf32>
    %c3_337 = arith.constant 3 : index
    %c2_338 = arith.constant 2 : index
    %686 = memref.load %arg2[%c3_337, %c2_338] : memref<24x8xf32, #tpu.memory_space<smem>>
    %687 = vector.broadcast %686 : f32 to vector<8x32xf32>
    %688 = arith.mulf %687, %5 : vector<8x32xf32>
    %689 = arith.addf %685, %688 : vector<8x32xf32>
    %c3_339 = arith.constant 3 : index
    %c3_340 = arith.constant 3 : index
    %690 = memref.load %arg2[%c3_339, %c3_340] : memref<24x8xf32, #tpu.memory_space<smem>>
    %691 = vector.broadcast %690 : f32 to vector<8x32xf32>
    %692 = arith.mulf %691, %7 : vector<8x32xf32>
    %693 = arith.addf %689, %692 : vector<8x32xf32>
    %c3_341 = arith.constant 3 : index
    %c4_342 = arith.constant 4 : index
    %694 = memref.load %arg2[%c3_341, %c4_342] : memref<24x8xf32, #tpu.memory_space<smem>>
    %695 = vector.broadcast %694 : f32 to vector<8x32xf32>
    %696 = arith.mulf %695, %9 : vector<8x32xf32>
    %697 = arith.addf %693, %696 : vector<8x32xf32>
    %c3_343 = arith.constant 3 : index
    %c5_344 = arith.constant 5 : index
    %698 = memref.load %arg2[%c3_343, %c5_344] : memref<24x8xf32, #tpu.memory_space<smem>>
    %699 = vector.broadcast %698 : f32 to vector<8x32xf32>
    %700 = arith.mulf %699, %11 : vector<8x32xf32>
    %701 = arith.addf %697, %700 : vector<8x32xf32>
    %c3_345 = arith.constant 3 : index
    %c6_346 = arith.constant 6 : index
    %702 = memref.load %arg2[%c3_345, %c6_346] : memref<24x8xf32, #tpu.memory_space<smem>>
    %703 = vector.broadcast %702 : f32 to vector<8x32xf32>
    %704 = arith.mulf %703, %13 : vector<8x32xf32>
    %705 = arith.addf %701, %704 : vector<8x32xf32>
    %c3_347 = arith.constant 3 : index
    %c7_348 = arith.constant 7 : index
    %706 = memref.load %arg2[%c3_347, %c7_348] : memref<24x8xf32, #tpu.memory_space<smem>>
    %707 = vector.broadcast %706 : f32 to vector<8x32xf32>
    %708 = arith.mulf %707, %15 : vector<8x32xf32>
    %709 = arith.addf %705, %708 : vector<8x32xf32>
    %cst_349 = arith.constant 0.000000e+00 : f32
    %710 = vector.broadcast %cst_349 : f32 to vector<8x2xf32>
    %711 = tpu.concatenate %709, %710 in 1 : vector<8x32xf32>, vector<8x2xf32> -> vector<8x34xf32>
    %c11 = arith.constant 11 : index
    %c0_350 = arith.constant 0 : index
    %712 = memref.load %arg2[%c11, %c0_350] : memref<24x8xf32, #tpu.memory_space<smem>>
    %713 = vector.broadcast %712 : f32 to vector<8x32xf32>
    %714 = arith.mulf %713, %1 : vector<8x32xf32>
    %c11_351 = arith.constant 11 : index
    %c1_352 = arith.constant 1 : index
    %715 = memref.load %arg2[%c11_351, %c1_352] : memref<24x8xf32, #tpu.memory_space<smem>>
    %716 = vector.broadcast %715 : f32 to vector<8x32xf32>
    %717 = arith.mulf %716, %3 : vector<8x32xf32>
    %718 = arith.addf %714, %717 : vector<8x32xf32>
    %c11_353 = arith.constant 11 : index
    %c2_354 = arith.constant 2 : index
    %719 = memref.load %arg2[%c11_353, %c2_354] : memref<24x8xf32, #tpu.memory_space<smem>>
    %720 = vector.broadcast %719 : f32 to vector<8x32xf32>
    %721 = arith.mulf %720, %5 : vector<8x32xf32>
    %722 = arith.addf %718, %721 : vector<8x32xf32>
    %c11_355 = arith.constant 11 : index
    %c3_356 = arith.constant 3 : index
    %723 = memref.load %arg2[%c11_355, %c3_356] : memref<24x8xf32, #tpu.memory_space<smem>>
    %724 = vector.broadcast %723 : f32 to vector<8x32xf32>
    %725 = arith.mulf %724, %7 : vector<8x32xf32>
    %726 = arith.addf %722, %725 : vector<8x32xf32>
    %c11_357 = arith.constant 11 : index
    %c4_358 = arith.constant 4 : index
    %727 = memref.load %arg2[%c11_357, %c4_358] : memref<24x8xf32, #tpu.memory_space<smem>>
    %728 = vector.broadcast %727 : f32 to vector<8x32xf32>
    %729 = arith.mulf %728, %9 : vector<8x32xf32>
    %730 = arith.addf %726, %729 : vector<8x32xf32>
    %c11_359 = arith.constant 11 : index
    %c5_360 = arith.constant 5 : index
    %731 = memref.load %arg2[%c11_359, %c5_360] : memref<24x8xf32, #tpu.memory_space<smem>>
    %732 = vector.broadcast %731 : f32 to vector<8x32xf32>
    %733 = arith.mulf %732, %11 : vector<8x32xf32>
    %734 = arith.addf %730, %733 : vector<8x32xf32>
    %c11_361 = arith.constant 11 : index
    %c6_362 = arith.constant 6 : index
    %735 = memref.load %arg2[%c11_361, %c6_362] : memref<24x8xf32, #tpu.memory_space<smem>>
    %736 = vector.broadcast %735 : f32 to vector<8x32xf32>
    %737 = arith.mulf %736, %13 : vector<8x32xf32>
    %738 = arith.addf %734, %737 : vector<8x32xf32>
    %c11_363 = arith.constant 11 : index
    %c7_364 = arith.constant 7 : index
    %739 = memref.load %arg2[%c11_363, %c7_364] : memref<24x8xf32, #tpu.memory_space<smem>>
    %740 = vector.broadcast %739 : f32 to vector<8x32xf32>
    %741 = arith.mulf %740, %15 : vector<8x32xf32>
    %742 = arith.addf %738, %741 : vector<8x32xf32>
    %cst_365 = arith.constant 0.000000e+00 : f32
    %743 = vector.broadcast %cst_365 : f32 to vector<8x1xf32>
    %cst_366 = arith.constant 0.000000e+00 : f32
    %744 = vector.broadcast %cst_366 : f32 to vector<8x1xf32>
    %745 = tpu.concatenate %743, %742, %744 in 1 : vector<8x1xf32>, vector<8x32xf32>, vector<8x1xf32> -> vector<8x34xf32>
    %746 = arith.addf %711, %745 : vector<8x34xf32>
    %c19 = arith.constant 19 : index
    %c0_367 = arith.constant 0 : index
    %747 = memref.load %arg2[%c19, %c0_367] : memref<24x8xf32, #tpu.memory_space<smem>>
    %748 = vector.broadcast %747 : f32 to vector<8x32xf32>
    %749 = arith.mulf %748, %1 : vector<8x32xf32>
    %c19_368 = arith.constant 19 : index
    %c1_369 = arith.constant 1 : index
    %750 = memref.load %arg2[%c19_368, %c1_369] : memref<24x8xf32, #tpu.memory_space<smem>>
    %751 = vector.broadcast %750 : f32 to vector<8x32xf32>
    %752 = arith.mulf %751, %3 : vector<8x32xf32>
    %753 = arith.addf %749, %752 : vector<8x32xf32>
    %c19_370 = arith.constant 19 : index
    %c2_371 = arith.constant 2 : index
    %754 = memref.load %arg2[%c19_370, %c2_371] : memref<24x8xf32, #tpu.memory_space<smem>>
    %755 = vector.broadcast %754 : f32 to vector<8x32xf32>
    %756 = arith.mulf %755, %5 : vector<8x32xf32>
    %757 = arith.addf %753, %756 : vector<8x32xf32>
    %c19_372 = arith.constant 19 : index
    %c3_373 = arith.constant 3 : index
    %758 = memref.load %arg2[%c19_372, %c3_373] : memref<24x8xf32, #tpu.memory_space<smem>>
    %759 = vector.broadcast %758 : f32 to vector<8x32xf32>
    %760 = arith.mulf %759, %7 : vector<8x32xf32>
    %761 = arith.addf %757, %760 : vector<8x32xf32>
    %c19_374 = arith.constant 19 : index
    %c4_375 = arith.constant 4 : index
    %762 = memref.load %arg2[%c19_374, %c4_375] : memref<24x8xf32, #tpu.memory_space<smem>>
    %763 = vector.broadcast %762 : f32 to vector<8x32xf32>
    %764 = arith.mulf %763, %9 : vector<8x32xf32>
    %765 = arith.addf %761, %764 : vector<8x32xf32>
    %c19_376 = arith.constant 19 : index
    %c5_377 = arith.constant 5 : index
    %766 = memref.load %arg2[%c19_376, %c5_377] : memref<24x8xf32, #tpu.memory_space<smem>>
    %767 = vector.broadcast %766 : f32 to vector<8x32xf32>
    %768 = arith.mulf %767, %11 : vector<8x32xf32>
    %769 = arith.addf %765, %768 : vector<8x32xf32>
    %c19_378 = arith.constant 19 : index
    %c6_379 = arith.constant 6 : index
    %770 = memref.load %arg2[%c19_378, %c6_379] : memref<24x8xf32, #tpu.memory_space<smem>>
    %771 = vector.broadcast %770 : f32 to vector<8x32xf32>
    %772 = arith.mulf %771, %13 : vector<8x32xf32>
    %773 = arith.addf %769, %772 : vector<8x32xf32>
    %c19_380 = arith.constant 19 : index
    %c7_381 = arith.constant 7 : index
    %774 = memref.load %arg2[%c19_380, %c7_381] : memref<24x8xf32, #tpu.memory_space<smem>>
    %775 = vector.broadcast %774 : f32 to vector<8x32xf32>
    %776 = arith.mulf %775, %15 : vector<8x32xf32>
    %777 = arith.addf %773, %776 : vector<8x32xf32>
    %cst_382 = arith.constant 0.000000e+00 : f32
    %778 = vector.broadcast %cst_382 : f32 to vector<8x2xf32>
    %779 = tpu.concatenate %778, %777 in 1 : vector<8x2xf32>, vector<8x32xf32> -> vector<8x34xf32>
    %780 = arith.addf %746, %779 : vector<8x34xf32>
    %781 = vector.extract_strided_slice %780 {offsets = [0, 0], sizes = [8, 33], strides = [1, 1]} : vector<8x34xf32> to vector<8x33xf32>
    %c3_383 = arith.constant 3 : index
    %782 = memref.load %arg3[%c3_383] : memref<8xf32, #tpu.memory_space<smem>>
    %783 = vector.broadcast %782 : f32 to vector<8x33xf32>
    %784 = arith.addf %781, %783 : vector<8x33xf32>
    %c7_384 = arith.constant 7 : index
    %c0_385 = arith.constant 0 : index
    %785 = memref.load %arg2[%c7_384, %c0_385] : memref<24x8xf32, #tpu.memory_space<smem>>
    %786 = vector.broadcast %785 : f32 to vector<8x32xf32>
    %787 = arith.mulf %786, %1 : vector<8x32xf32>
    %c7_386 = arith.constant 7 : index
    %c1_387 = arith.constant 1 : index
    %788 = memref.load %arg2[%c7_386, %c1_387] : memref<24x8xf32, #tpu.memory_space<smem>>
    %789 = vector.broadcast %788 : f32 to vector<8x32xf32>
    %790 = arith.mulf %789, %3 : vector<8x32xf32>
    %791 = arith.addf %787, %790 : vector<8x32xf32>
    %c7_388 = arith.constant 7 : index
    %c2_389 = arith.constant 2 : index
    %792 = memref.load %arg2[%c7_388, %c2_389] : memref<24x8xf32, #tpu.memory_space<smem>>
    %793 = vector.broadcast %792 : f32 to vector<8x32xf32>
    %794 = arith.mulf %793, %5 : vector<8x32xf32>
    %795 = arith.addf %791, %794 : vector<8x32xf32>
    %c7_390 = arith.constant 7 : index
    %c3_391 = arith.constant 3 : index
    %796 = memref.load %arg2[%c7_390, %c3_391] : memref<24x8xf32, #tpu.memory_space<smem>>
    %797 = vector.broadcast %796 : f32 to vector<8x32xf32>
    %798 = arith.mulf %797, %7 : vector<8x32xf32>
    %799 = arith.addf %795, %798 : vector<8x32xf32>
    %c7_392 = arith.constant 7 : index
    %c4_393 = arith.constant 4 : index
    %800 = memref.load %arg2[%c7_392, %c4_393] : memref<24x8xf32, #tpu.memory_space<smem>>
    %801 = vector.broadcast %800 : f32 to vector<8x32xf32>
    %802 = arith.mulf %801, %9 : vector<8x32xf32>
    %803 = arith.addf %799, %802 : vector<8x32xf32>
    %c7_394 = arith.constant 7 : index
    %c5_395 = arith.constant 5 : index
    %804 = memref.load %arg2[%c7_394, %c5_395] : memref<24x8xf32, #tpu.memory_space<smem>>
    %805 = vector.broadcast %804 : f32 to vector<8x32xf32>
    %806 = arith.mulf %805, %11 : vector<8x32xf32>
    %807 = arith.addf %803, %806 : vector<8x32xf32>
    %c7_396 = arith.constant 7 : index
    %c6_397 = arith.constant 6 : index
    %808 = memref.load %arg2[%c7_396, %c6_397] : memref<24x8xf32, #tpu.memory_space<smem>>
    %809 = vector.broadcast %808 : f32 to vector<8x32xf32>
    %810 = arith.mulf %809, %13 : vector<8x32xf32>
    %811 = arith.addf %807, %810 : vector<8x32xf32>
    %c7_398 = arith.constant 7 : index
    %c7_399 = arith.constant 7 : index
    %812 = memref.load %arg2[%c7_398, %c7_399] : memref<24x8xf32, #tpu.memory_space<smem>>
    %813 = vector.broadcast %812 : f32 to vector<8x32xf32>
    %814 = arith.mulf %813, %15 : vector<8x32xf32>
    %815 = arith.addf %811, %814 : vector<8x32xf32>
    %cst_400 = arith.constant 0.000000e+00 : f32
    %816 = vector.broadcast %cst_400 : f32 to vector<8x2xf32>
    %817 = tpu.concatenate %815, %816 in 1 : vector<8x32xf32>, vector<8x2xf32> -> vector<8x34xf32>
    %c15 = arith.constant 15 : index
    %c0_401 = arith.constant 0 : index
    %818 = memref.load %arg2[%c15, %c0_401] : memref<24x8xf32, #tpu.memory_space<smem>>
    %819 = vector.broadcast %818 : f32 to vector<8x32xf32>
    %820 = arith.mulf %819, %1 : vector<8x32xf32>
    %c15_402 = arith.constant 15 : index
    %c1_403 = arith.constant 1 : index
    %821 = memref.load %arg2[%c15_402, %c1_403] : memref<24x8xf32, #tpu.memory_space<smem>>
    %822 = vector.broadcast %821 : f32 to vector<8x32xf32>
    %823 = arith.mulf %822, %3 : vector<8x32xf32>
    %824 = arith.addf %820, %823 : vector<8x32xf32>
    %c15_404 = arith.constant 15 : index
    %c2_405 = arith.constant 2 : index
    %825 = memref.load %arg2[%c15_404, %c2_405] : memref<24x8xf32, #tpu.memory_space<smem>>
    %826 = vector.broadcast %825 : f32 to vector<8x32xf32>
    %827 = arith.mulf %826, %5 : vector<8x32xf32>
    %828 = arith.addf %824, %827 : vector<8x32xf32>
    %c15_406 = arith.constant 15 : index
    %c3_407 = arith.constant 3 : index
    %829 = memref.load %arg2[%c15_406, %c3_407] : memref<24x8xf32, #tpu.memory_space<smem>>
    %830 = vector.broadcast %829 : f32 to vector<8x32xf32>
    %831 = arith.mulf %830, %7 : vector<8x32xf32>
    %832 = arith.addf %828, %831 : vector<8x32xf32>
    %c15_408 = arith.constant 15 : index
    %c4_409 = arith.constant 4 : index
    %833 = memref.load %arg2[%c15_408, %c4_409] : memref<24x8xf32, #tpu.memory_space<smem>>
    %834 = vector.broadcast %833 : f32 to vector<8x32xf32>
    %835 = arith.mulf %834, %9 : vector<8x32xf32>
    %836 = arith.addf %832, %835 : vector<8x32xf32>
    %c15_410 = arith.constant 15 : index
    %c5_411 = arith.constant 5 : index
    %837 = memref.load %arg2[%c15_410, %c5_411] : memref<24x8xf32, #tpu.memory_space<smem>>
    %838 = vector.broadcast %837 : f32 to vector<8x32xf32>
    %839 = arith.mulf %838, %11 : vector<8x32xf32>
    %840 = arith.addf %836, %839 : vector<8x32xf32>
    %c15_412 = arith.constant 15 : index
    %c6_413 = arith.constant 6 : index
    %841 = memref.load %arg2[%c15_412, %c6_413] : memref<24x8xf32, #tpu.memory_space<smem>>
    %842 = vector.broadcast %841 : f32 to vector<8x32xf32>
    %843 = arith.mulf %842, %13 : vector<8x32xf32>
    %844 = arith.addf %840, %843 : vector<8x32xf32>
    %c15_414 = arith.constant 15 : index
    %c7_415 = arith.constant 7 : index
    %845 = memref.load %arg2[%c15_414, %c7_415] : memref<24x8xf32, #tpu.memory_space<smem>>
    %846 = vector.broadcast %845 : f32 to vector<8x32xf32>
    %847 = arith.mulf %846, %15 : vector<8x32xf32>
    %848 = arith.addf %844, %847 : vector<8x32xf32>
    %cst_416 = arith.constant 0.000000e+00 : f32
    %849 = vector.broadcast %cst_416 : f32 to vector<8x1xf32>
    %cst_417 = arith.constant 0.000000e+00 : f32
    %850 = vector.broadcast %cst_417 : f32 to vector<8x1xf32>
    %851 = tpu.concatenate %849, %848, %850 in 1 : vector<8x1xf32>, vector<8x32xf32>, vector<8x1xf32> -> vector<8x34xf32>
    %852 = arith.addf %817, %851 : vector<8x34xf32>
    %c23 = arith.constant 23 : index
    %c0_418 = arith.constant 0 : index
    %853 = memref.load %arg2[%c23, %c0_418] : memref<24x8xf32, #tpu.memory_space<smem>>
    %854 = vector.broadcast %853 : f32 to vector<8x32xf32>
    %855 = arith.mulf %854, %1 : vector<8x32xf32>
    %c23_419 = arith.constant 23 : index
    %c1_420 = arith.constant 1 : index
    %856 = memref.load %arg2[%c23_419, %c1_420] : memref<24x8xf32, #tpu.memory_space<smem>>
    %857 = vector.broadcast %856 : f32 to vector<8x32xf32>
    %858 = arith.mulf %857, %3 : vector<8x32xf32>
    %859 = arith.addf %855, %858 : vector<8x32xf32>
    %c23_421 = arith.constant 23 : index
    %c2_422 = arith.constant 2 : index
    %860 = memref.load %arg2[%c23_421, %c2_422] : memref<24x8xf32, #tpu.memory_space<smem>>
    %861 = vector.broadcast %860 : f32 to vector<8x32xf32>
    %862 = arith.mulf %861, %5 : vector<8x32xf32>
    %863 = arith.addf %859, %862 : vector<8x32xf32>
    %c23_423 = arith.constant 23 : index
    %c3_424 = arith.constant 3 : index
    %864 = memref.load %arg2[%c23_423, %c3_424] : memref<24x8xf32, #tpu.memory_space<smem>>
    %865 = vector.broadcast %864 : f32 to vector<8x32xf32>
    %866 = arith.mulf %865, %7 : vector<8x32xf32>
    %867 = arith.addf %863, %866 : vector<8x32xf32>
    %c23_425 = arith.constant 23 : index
    %c4_426 = arith.constant 4 : index
    %868 = memref.load %arg2[%c23_425, %c4_426] : memref<24x8xf32, #tpu.memory_space<smem>>
    %869 = vector.broadcast %868 : f32 to vector<8x32xf32>
    %870 = arith.mulf %869, %9 : vector<8x32xf32>
    %871 = arith.addf %867, %870 : vector<8x32xf32>
    %c23_427 = arith.constant 23 : index
    %c5_428 = arith.constant 5 : index
    %872 = memref.load %arg2[%c23_427, %c5_428] : memref<24x8xf32, #tpu.memory_space<smem>>
    %873 = vector.broadcast %872 : f32 to vector<8x32xf32>
    %874 = arith.mulf %873, %11 : vector<8x32xf32>
    %875 = arith.addf %871, %874 : vector<8x32xf32>
    %c23_429 = arith.constant 23 : index
    %c6_430 = arith.constant 6 : index
    %876 = memref.load %arg2[%c23_429, %c6_430] : memref<24x8xf32, #tpu.memory_space<smem>>
    %877 = vector.broadcast %876 : f32 to vector<8x32xf32>
    %878 = arith.mulf %877, %13 : vector<8x32xf32>
    %879 = arith.addf %875, %878 : vector<8x32xf32>
    %c23_431 = arith.constant 23 : index
    %c7_432 = arith.constant 7 : index
    %880 = memref.load %arg2[%c23_431, %c7_432] : memref<24x8xf32, #tpu.memory_space<smem>>
    %881 = vector.broadcast %880 : f32 to vector<8x32xf32>
    %882 = arith.mulf %881, %15 : vector<8x32xf32>
    %883 = arith.addf %879, %882 : vector<8x32xf32>
    %cst_433 = arith.constant 0.000000e+00 : f32
    %884 = vector.broadcast %cst_433 : f32 to vector<8x2xf32>
    %885 = tpu.concatenate %884, %883 in 1 : vector<8x2xf32>, vector<8x32xf32> -> vector<8x34xf32>
    %886 = arith.addf %852, %885 : vector<8x34xf32>
    %887 = vector.extract_strided_slice %886 {offsets = [0, 0], sizes = [8, 33], strides = [1, 1]} : vector<8x34xf32> to vector<8x33xf32>
    %c7_434 = arith.constant 7 : index
    %888 = memref.load %arg3[%c7_434] : memref<8xf32, #tpu.memory_space<smem>>
    %889 = vector.broadcast %888 : f32 to vector<8x33xf32>
    %890 = arith.addf %887, %889 : vector<8x33xf32>
    %891 = arith.negf %890 : vector<8x33xf32>
    %892 = math.exp %891 : vector<8x33xf32>
    %cst_435 = arith.constant 1.000000e+00 : f32
    %893 = vector.broadcast %cst_435 : f32 to vector<8x33xf32>
    %894 = arith.addf %893, %892 : vector<8x33xf32>
    %895 = arith.divf %893, %894 : vector<8x33xf32>
    %896 = arith.mulf %784, %895 : vector<8x33xf32>
    %c3_436 = arith.constant 3 : index
    %c0_437 = arith.constant 0 : index
    %c0_438 = arith.constant 0 : index
    %897 = vector.load %arg4[%c3_436, %c0_437, %c0_438] : memref<4x8x33xf32, #tpu.memory_space<vmem>>, vector<1x8x33xf32>
    %898 = vector.shape_cast %897 : vector<1x8x33xf32> to vector<8x33xf32>
    %899 = vector.shape_cast %896 : vector<8x33xf32> to vector<1x8x33xf32>
    tpu.vector_store %arg4[%c3_436, %c0_437, %c0_438], %899 {strides = array<i32>} : memref<4x8x33xf32, #tpu.memory_space<vmem>>, vector<1x8x33xf32>,
    return
  }
  func.func @transform_0(%arg0: i32) -> (i32, i32, i32) {
    %c0_i32 = arith.constant 0 : i32
    %c0_i32_0 = arith.constant 0 : i32
    %c0_i32_1 = arith.constant 0 : i32
    return %c0_i32, %arg0, %c0_i32_0 : i32, i32, i32
  }
  func.func @transform_1(%arg0: i32) -> (i32, i32) {
    %c0_i32 = arith.constant 0 : i32
    %c0_i32_0 = arith.constant 0 : i32
    %c0_i32_1 = arith.constant 0 : i32
    return %c0_i32, %c0_i32_0 : i32, i32
  }
  func.func @transform_2(%arg0: i32) -> i32 {
    %c0_i32 = arith.constant 0 : i32
    %c0_i32_0 = arith.constant 0 : i32
    return %c0_i32 : i32
  }
  func.func @transform_3(%arg0: i32) -> (i32, i32, i32) {
    %c0_i32 = arith.constant 0 : i32
    %c0_i32_0 = arith.constant 0 : i32
    %c0_i32_1 = arith.constant 0 : i32
    return %c0_i32, %arg0, %c0_i32_0 : i32, i32, i32
  }
}

</mosaic_0001>

<llo_original>
// kernel: gate_conv_transpose2d_fw.1
$region0: #{gate_conv_transpose2d_fw.1}
  #allocation0 [shape = 'u32[]', space=smem, size = 0x4, offset = 0x4, fixed_abs, tag = 'smem constant byte address 0x4 - core index']
  #allocation1 [shape = 'u32[144,128]{1,0:T(1,128)}', space=vmem, size = 0x12000, scoped, tag = 'internal scratch']
  %s0 = inlined_call_operand.vmem [shape: f32[8,16,32], index: 0, kind: input, shape index: {}]
  %s1 = inlined_call_operand.vmem [shape: f32[24,8], index: 1, kind: input, shape index: {}]
  %s2 = inlined_call_operand.vmem [shape: f32[8], index: 2, kind: input, shape index: {}]
  %s3 = inlined_call_operand.hbm [shape: f32[4,16,33], index: 3, kind: output, shape index: {}]
  %s4 = sld [smem:[#allocation0]]
  $region91: #{gate_conv_transpose2d_fw.1} parent=0
    _
  %s6 = ssub.s32 1, %s4
  %s7 = scalar_select 0, %s6, %s4
  $region1: #{gate_conv_transpose2d_fw.1} parent=0
    #allocation2 [shape = 'u8[65536]{0}', space=vmem, size = 0x10000, scoped, tag = 'input window, operand 0']
    #allocation3 [shape = 'u8[12288]{0}', space=smem, size = 0x3000, scoped, tag = 'input window, operand 1, single buffered']
    #allocation4 [shape = 's32[2]{0}', space=sflag, size = 0x8, scoped, tag = 'scoped memory for gate_conv_transpose2d_fw.1']
    #allocation5 [shape = 's32[2]{0}', space=sflag, size = 0x8, scoped, tag = 'scoped memory for gate_conv_transpose2d_fw.1']
    #allocation6 [shape = 'u8[512]{0}', space=smem, size = 0x200, scoped, tag = 'input window, operand 2, single buffered']
    #allocation7 [shape = 's32[1]{0}', space=sflag, size = 0x4, scoped, tag = 'scoped memory for gate_conv_transpose2d_fw.1']
    #allocation8 [shape = 'u8[32768]{0}', space=vmem, size = 0x8000, scoped, tag = 'output window, operand 0']
    %8 = vsyncpa [#allocation5], 0
    %9 = vsyncpa [#allocation7], 0
    %10 = vsyncpa [#allocation4], 0
    %s11 = scalar_lea.sflag [#allocation4], 1
    %12 = vsyncpa %s11, 0
    loop: start=0, step=1, limit=4
    $region2: #{gate_conv_transpose2d_fw.1} parent=1 // loop_pre_header
      _
    $region3: #{gate_conv_transpose2d_fw.1} parent=1 // loop_header
      %s14 = sphi 0, %s18
      %p15 = scmp.ge.s32.totalorder %s14, 4
      %s24 = sphi 0, %s26
      %s27 = sphi 0, %s24
      %s28 = sphi 0, %s27
      %s44 = sphi 0, %s28
      %s48 = sphi 0, %s48
      %s50 = sphi 0, %s48
      %s51 = sphi 0, %s50
      %s65 = sphi 0, %s51
      %s69 = sphi 0, %s69
      %s71 = sphi 0, %s69
      %s72 = sphi 0, %s71
      %s86 = sphi 0, %s72
      %s92 = sphi 0, %s94
      %s95 = sphi 0, %s92
      %s96 = sphi 0, %s95
      %s112 = sphi 0, %s96
    $region4: #{gate_conv_transpose2d_fw.1} parent=1 // loop_header_branch
      %17 = sbr.rel (%p15) target = $region8
    $region5: #{gate_conv_transpose2d_fw.1} parent=1 // loop_body
      %s19 = ssub.s32 %s14, 1
      %s20 = ssub.s32 %s14, 2
      %s21 = sadd.s32 %s14, 1
      %s22 = ssub.s32 %s14, %s21
      %p23 = scmp.eq.s32.totalorder %s22, 0
      %s25 = sadd.s32 %s24, 1
      %s26 = scalar_select %p23, %s24, %s25
      %p29 = pneg %p23
      %p30 = scmp.eq.s32.totalorder %s14, 1
      %p31 = por %p29, %p30
      %p32 = scmp.ne.s32.totalorder %s24, %s27
      %p33 = scmp.eq.s32.totalorder %s14, 0
      %p34 = por %p32, %p33
      %p35 = scmp.ne.s32.totalorder %s24, %s27
      %p36 = scmp.eq.s32.totalorder %s19, 1
      %p37 = por %p35, %p36
      %p38 = scmp.ne.s32.totalorder %s27, %s28
      %p39 = scmp.eq.s32.totalorder %s19, 0
      %p40 = por %p38, %p39
      %p41 = scmp.ne.s32.totalorder %s27, %s28
      %p42 = scmp.eq.s32.totalorder %s20, 1
      %p43 = por %p41, %p42
      %p45 = scmp.ne.s32.totalorder %s28, %s44
      %p46 = scmp.eq.s32.totalorder %s20, 0
      %p47 = por %p45, %p46
      %s49 = sadd.s32 %s48, 1
      %p52 = scmp.eq.s32.totalorder %s14, 1
      %p53 = scmp.ne.s32.totalorder %s48, %s50
      %p54 = scmp.eq.s32.totalorder %s14, 0
      %p55 = por %p53, %p54
      %p56 = scmp.ne.s32.totalorder %s48, %s50
      %p57 = scmp.eq.s32.totalorder %s19, 1
      %p58 = por %p56, %p57
      %p59 = scmp.ne.s32.totalorder %s50, %s51
      %p60 = scmp.eq.s32.totalorder %s19, 0
      %p61 = por %p59, %p60
      %p62 = scmp.ne.s32.totalorder %s50, %s51
      %p63 = scmp.eq.s32.totalorder %s20, 1
      %p64 = por %p62, %p63
      %p66 = scmp.ne.s32.totalorder %s51, %s65
      %p67 = scmp.eq.s32.totalorder %s20, 0
      %p68 = por %p66, %p67
      %s70 = sadd.s32 %s69, 1
      %p73 = scmp.eq.s32.totalorder %s14, 1
      %p74 = scmp.ne.s32.totalorder %s69, %s71
      %p75 = scmp.eq.s32.totalorder %s14, 0
      %p76 = por %p74, %p75
      %p77 = scmp.ne.s32.totalorder %s69, %s71
      %p78 = scmp.eq.s32.totalorder %s19, 1
      %p79 = por %p77, %p78
      %p80 = scmp.ne.s32.totalorder %s71, %s72
      %p81 = scmp.eq.s32.totalorder %s19, 0
      %p82 = por %p80, %p81
      %p83 = scmp.ne.s32.totalorder %s71, %s72
      %p84 = scmp.eq.s32.totalorder %s20, 1
      %p85 = por %p83, %p84
      %p87 = scmp.ne.s32.totalorder %s72, %s86
      %p88 = scmp.eq.s32.totalorder %s20, 0
      %p89 = por %p87, %p88
      %s90 = ssub.s32 %s14, %s21
      %p91 = scmp.eq.s32.totalorder %s90, 0
      %s93 = sadd.s32 %s92, 1
      %s94 = scalar_select %p91, %s92, %s93
      %p97 = pneg %p91
      %p98 = scmp.eq.s32.totalorder %s14, 1
      %p99 = por %p97, %p98
      %p100 = scmp.ne.s32.totalorder %s92, %s95
      %p101 = scmp.eq.s32.totalorder %s14, 0
      %p102 = por %p100, %p101
      %p103 = scmp.ne.s32.totalorder %s92, %s95
      %p104 = scmp.eq.s32.totalorder %s19, 1
      %p105 = por %p103, %p104
      %p106 = scmp.ne.s32.totalorder %s95, %s96
      %p107 = scmp.eq.s32.totalorder %s19, 0
      %p108 = por %p106, %p107
      %p109 = scmp.ne.s32.totalorder %s95, %s96
      %p110 = scmp.eq.s32.totalorder %s20, 1
      %p111 = por %p109, %p110
      %p113 = scmp.ne.s32.totalorder %s96, %s112
      %p114 = scmp.eq.s32.totalorder %s20, 0
      %p115 = por %p113, %p114
      %p116 = scmp.le.s32.totalorder 1, %s14
      %p117 = scmp.lt.s32.totalorder %s14, 3
      %p118 = pnand %p116, %p117
      %p119 = pneg %p118
      // Predicated region
      $region9: #{gate_conv_transpose2d_fw.1} parent=5 // pred_check
        _
      $region10: #{gate_conv_transpose2d_fw.1} parent=5 // pred_check_branch
        %121 = sbr.rel (%p118) target = $region12
      $region11: #{gate_conv_transpose2d_fw.1} parent=5 // pred_region
        %s122 = ssub.s32 %s14, 1
        // Predicated region
        $region13: #{gate_conv_transpose2d_fw.1} parent=11 // pred_check
          %p123 = pneg %p61
        $region14: #{gate_conv_transpose2d_fw.1} parent=11 // pred_check_branch
          %125 = sbr.rel (%p123) target = $region16
        $region15: #{gate_conv_transpose2d_fw.1} parent=11 // pred_region
          %s127 = ssub.s32 384, 384
          %128 = vsyncadd [#allocation5], %s127
          %s129 = sshll.u32 %s1, 4
          %s130 = int_to_ptr.vmem [resolvable:$true] %s129
          %135 = dma.vmem_to_smem %s130, 384, [#allocation3], [#allocation5], 128, 128, 8
        $region16: #{gate_conv_transpose2d_fw.1} parent=11 // pred_fallthru
          _
        // Predicated region
        $region17: #{gate_conv_transpose2d_fw.1} parent=11 // pred_check
          %p136 = pneg %p82
        $region18: #{gate_conv_transpose2d_fw.1} parent=11 // pred_check_branch
          %138 = sbr.rel (%p136) target = $region20
        $region19: #{gate_conv_transpose2d_fw.1} parent=11 // pred_region
          %s140 = ssub.s32 16, 16
          %141 = vsyncadd [#allocation7], %s140
          %s143 = sshll.u32 %s2, 4
          %s144 = int_to_ptr.vmem [resolvable:$true] %s143
          %146 = dma.vmem_to_smem %s144, 16, [#allocation6], [#allocation7]
        $region20: #{gate_conv_transpose2d_fw.1} parent=11 // pred_fallthru
          _
      $region12: #{gate_conv_transpose2d_fw.1} parent=5 // pred_fallthru
        _
      %p147 = scmp.lt.s32.totalorder %s14, 2
      // Predicated region
      $region21: #{gate_conv_transpose2d_fw.1} parent=5 // pred_check
        %p148 = pneg %p147
      $region22: #{gate_conv_transpose2d_fw.1} parent=5 // pred_check_branch
        %150 = sbr.rel (%p148) target = $region24
      $region23: #{gate_conv_transpose2d_fw.1} parent=5 // pred_region
        // Predicated region
        $region25: #{gate_conv_transpose2d_fw.1} parent=23 // pred_check
          %p151 = pneg %p34
        $region26: #{gate_conv_transpose2d_fw.1} parent=23 // pred_check_branch
          %153 = sbr.rel (%p151) target = $region28
        $region27: #{gate_conv_transpose2d_fw.1} parent=23 // pred_region
          %s154 = sand.u32 %s24, 1
          %s155 = sand.u32 %s24, 1
          %s156 = smul.addr %s155, 64
          %s157 = scalar_lea.vmem [#allocation2], %s156
          %s158 = smul.addr %s14, 8
          %s159 = scalar_lea.vmem %s0, %s158
          // Predicated region
          $region29: #{gate_conv_transpose2d_fw.1} parent=27 // pred_check
            _
          $region30: #{gate_conv_transpose2d_fw.1} parent=27 // pred_check_branch
            %161 = sbr.rel (0) target = $region32
          $region31: #{gate_conv_transpose2d_fw.1} parent=27 // pred_region
            // Predicated region
            $region33: #{gate_conv_transpose2d_fw.1} parent=31 // pred_check
              _
            $region34: #{gate_conv_transpose2d_fw.1} parent=31 // pred_check_branch
              %163 = sbr.rel (0) target = $region36
            $region35: #{gate_conv_transpose2d_fw.1} parent=31 // pred_region
              // Predicated region
              $region48: #{gate_conv_transpose2d_fw.1} parent=35 // pred_check
                _
              $region49: #{gate_conv_transpose2d_fw.1} parent=35 // pred_check_branch
                %193 = sbr.rel (0) target = $region51
              $region50: #{gate_conv_transpose2d_fw.1} parent=35 // pred_region
                loop: start=0, step=1, limit=1
                $region52: #{gate_conv_transpose2d_fw.1} parent=50 // loop_pre_header
                  _
                $region53: #{gate_conv_transpose2d_fw.1} parent=50 // loop_header
                  %s195 = sphi 0, %s199
                  %p196 = scmp.ge.s32.totalorder %s195, 1
                  %s200 = sphi %s159, %s159
                  %s201 = sphi %s157, %s157
                $region54: #{gate_conv_transpose2d_fw.1} parent=50 // loop_header_branch
                  %198 = sbr.rel (%p196) target = $region58
                $region55: #{gate_conv_transpose2d_fw.1} parent=50 // loop_body
                  %v202 = vld [vmem:[%s200] sm:$0xff]
                  %203 = vst [vmem:[%s201] sm:$0xff] %v202
                  %v204 = vld [vmem:[%s200 + $0x10] sm:$0xff]
                  %205 = vst [vmem:[%s201 + $0x8] sm:$0xff] %v204
                  %v206 = vld [vmem:[%s200 + $0x20] sm:$0xff]
                  %207 = vst [vmem:[%s201 + $0x10] sm:$0xff] %v206
                  %v208 = vld [vmem:[%s200 + $0x30] sm:$0xff]
                  %209 = vst [vmem:[%s201 + $0x18] sm:$0xff] %v208
                  %v210 = vld [vmem:[%s200 + $0x40] sm:$0xff]
                  %211 = vst [vmem:[%s201 + $0x20] sm:$0xff] %v210
                  %v212 = vld [vmem:[%s200 + $0x50] sm:$0xff]
                  %213 = vst [vmem:[%s201 + $0x28] sm:$0xff] %v212
                  %v214 = vld [vmem:[%s200 + $0x60] sm:$0xff]
                  %215 = vst [vmem:[%s201 + $0x30] sm:$0xff] %v214
                  %v216 = vld [vmem:[%s200 + $0x70] sm:$0xff]
                  %217 = vst [vmem:[%s201 + $0x38] sm:$0xff] %v216
                $region56: #{gate_conv_transpose2d_fw.1} parent=50 // loop_footer
                  %s199 = sadd.s32 1, %s195
                $region57: #{gate_conv_transpose2d_fw.1} parent=50 // loop_footer_branch
                  %194 = sbr.rel target = $region53
                $region58: #{gate_conv_transpose2d_fw.1} parent=50 // loop_exit
                  _
              $region51: #{gate_conv_transpose2d_fw.1} parent=35 // pred_fallthru
                _
              // Predicated region
              $region59: #{gate_conv_transpose2d_fw.1} parent=35 // pred_check
                _
              $region60: #{gate_conv_transpose2d_fw.1} parent=35 // pred_check_branch
                %219 = sbr.rel target = $region62
              $region61: #{gate_conv_transpose2d_fw.1} parent=35 // pred_region
                _
              $region62: #{gate_conv_transpose2d_fw.1} parent=35 // pred_fallthru
                _
            $region36: #{gate_conv_transpose2d_fw.1} parent=31 // pred_fallthru
              _
            // Predicated region
            $region37: #{gate_conv_transpose2d_fw.1} parent=31 // pred_check
              _
            $region38: #{gate_conv_transpose2d_fw.1} parent=31 // pred_check_branch
              %165 = sbr.rel target = $region40
            $region39: #{gate_conv_transpose2d_fw.1} parent=31 // pred_region
              %s167 = ssub.s32 256, 1
              loop: start=0, step=1, limit=1
              $region41: #{gate_conv_transpose2d_fw.1} parent=39 // loop_pre_header
                _
              $region42: #{gate_conv_transpose2d_fw.1} parent=39 // loop_header
                %s169 = sphi 0, %s173
                %p170 = scmp.ge.s32.totalorder %s169, 1
                %s174 = sphi %s159, %s159
                %s175 = sphi %s157, %s157
              $region43: #{gate_conv_transpose2d_fw.1} parent=39 // loop_header_branch
                %172 = sbr.rel (%p170) target = $region47
              $region44: #{gate_conv_transpose2d_fw.1} parent=39 // loop_body
                %v176 = vld [vmem:[%s174] sm:%s167]
                %177 = vst [vmem:[%s175] sm:%s167] %v176
                %v178 = vld [vmem:[%s174 + $0x10] sm:%s167]
                %179 = vst [vmem:[%s175 + $0x8] sm:%s167] %v178
                %v180 = vld [vmem:[%s174 + $0x20] sm:%s167]
                %181 = vst [vmem:[%s175 + $0x10] sm:%s167] %v180
                %v182 = vld [vmem:[%s174 + $0x30] sm:%s167]
                %183 = vst [vmem:[%s175 + $0x18] sm:%s167] %v182
                %v184 = vld [vmem:[%s174 + $0x40] sm:%s167]
                %185 = vst [vmem:[%s175 + $0x20] sm:%s167] %v184
                %v186 = vld [vmem:[%s174 + $0x50] sm:%s167]
                %187 = vst [vmem:[%s175 + $0x28] sm:%s167] %v186
                %v188 = vld [vmem:[%s174 + $0x60] sm:%s167]
                %189 = vst [vmem:[%s175 + $0x30] sm:%s167] %v188
                %v190 = vld [vmem:[%s174 + $0x70] sm:%s167]
                %191 = vst [vmem:[%s175 + $0x38] sm:%s167] %v190
              $region45: #{gate_conv_transpose2d_fw.1} parent=39 // loop_footer
                %s173 = sadd.s32 1, %s169
              $region46: #{gate_conv_transpose2d_fw.1} parent=39 // loop_footer_branch
                %168 = sbr.rel target = $region42
              $region47: #{gate_conv_transpose2d_fw.1} parent=39 // loop_exit
                _
            $region40: #{gate_conv_transpose2d_fw.1} parent=31 // pred_fallthru
              _
          $region32: #{gate_conv_transpose2d_fw.1} parent=27 // pred_fallthru
            _
          %220 = vnop
        $region28: #{gate_conv_transpose2d_fw.1} parent=23 // pred_fallthru
          _
      $region24: #{gate_conv_transpose2d_fw.1} parent=5 // pred_fallthru
        _
      %p221 = scmp.le.s32.totalorder 1, %s14
      %p222 = scmp.lt.s32.totalorder %s14, 3
      %p223 = pnand %p221, %p222
      %p224 = pneg %p223
      // Predicated region
      $region63: #{gate_conv_transpose2d_fw.1} parent=5 // pred_check
        _
      $region64: #{gate_conv_transpose2d_fw.1} parent=5 // pred_check_branch
        %226 = sbr.rel (%p223) target = $region66
      $region65: #{gate_conv_transpose2d_fw.1} parent=5 // pred_region
        %s227 = ssub.s32 %s14, 1
        %s228 = sand.u32 %s27, 1
        %s229 = sand.u32 %s27, 1
        %s230 = smul.addr %s229, 64
        %s231 = scalar_lea.vmem [#allocation2], %s230
        // Predicated region
        $region67: #{gate_conv_transpose2d_fw.1} parent=65 // pred_check
          %p232 = pneg %p40
        $region68: #{gate_conv_transpose2d_fw.1} parent=65 // pred_check_branch
          %234 = sbr.rel (%p232) target = $region70
        $region69: #{gate_conv_transpose2d_fw.1} parent=65 // pred_region
          _
        $region70: #{gate_conv_transpose2d_fw.1} parent=65 // pred_fallthru
          _
        // Predicated region
        $region71: #{gate_conv_transpose2d_fw.1} parent=65 // pred_check
          %p235 = pneg %p61
        $region72: #{gate_conv_transpose2d_fw.1} parent=65 // pred_check_branch
          %237 = sbr.rel (%p235) target = $region74
        $region73: #{gate_conv_transpose2d_fw.1} parent=65 // pred_region
          %238 = dma.done [#allocation5], 384
        $region74: #{gate_conv_transpose2d_fw.1} parent=65 // pred_fallthru
          _
        // Predicated region
        $region75: #{gate_conv_transpose2d_fw.1} parent=65 // pred_check
          %p239 = pneg %p82
        $region76: #{gate_conv_transpose2d_fw.1} parent=65 // pred_check_branch
          %241 = sbr.rel (%p239) target = $region78
        $region77: #{gate_conv_transpose2d_fw.1} parent=65 // pred_region
          %242 = dma.done [#allocation7], 16
        $region78: #{gate_conv_transpose2d_fw.1} parent=65 // pred_fallthru
          _
        %243 = sfence
        %s244 = sand.u32 %s27, 1
        %s245 = sand.u32 %s27, 1
        %s246 = smul.addr %s245, 64
        %s247 = scalar_lea.vmem [#allocation2], %s246
        %p248 = pneg %p40
        %p249 = pneg %p37
        %p250 = pneg %p61
        %p251 = pneg %p58
        %p252 = pneg %p82
        %p253 = pneg %p79
        %p254 = pneg %p108
        %p255 = pneg %p105
        %s256 = sand.u32 %s95, 1
        %s257 = scalar_lea.sflag [#allocation4], %s256
        %s258 = sand.u32 %s95, 1
        %s259 = smul.addr %s258, 32
        %s260 = scalar_lea.vmem [#allocation8], %s259
        %v261 = vld [vmem:[%s231] sm:$0xff]
        %s262 = scalar_lea.vmem %s231, 8 [#allocation2]
        %v263 = vld [vmem:[%s262] sm:$0xff]
        %s264 = scalar_lea.vmem %s231, 16 [#allocation2]
        %v265 = vld [vmem:[%s264] sm:$0xff]
        %s266 = scalar_lea.vmem %s231, 24 [#allocation2]
        %v267 = vld [vmem:[%s266] sm:$0xff]
        %s268 = scalar_lea.vmem %s231, 32 [#allocation2]
        %v269 = vld [vmem:[%s268] sm:$0xff]
        %s270 = scalar_lea.vmem %s231, 40 [#allocation2]
        %v271 = vld [vmem:[%s270] sm:$0xff]
        %s272 = scalar_lea.vmem %s231, 48 [#allocation2]
        %v273 = vld [vmem:[%s272] sm:$0xff]
        %s274 = scalar_lea.vmem %s231, 56 [#allocation2]
        %v275 = vld [vmem:[%s274] sm:$0xff]
        %s276 = sld [smem:[#allocation3]]
        %v277 = vstv %s276
        %v278 = vmul.f32 %v277, %v261
        %s279 = sld [smem:[#allocation3 + $0x1]]
        %v280 = vstv %s279
        %v281 = vmul.f32 %v280, %v263
        %v282 = vadd.f32 %v278, %v281
        %s283 = sld [smem:[#allocation3 + $0x2]]
        %v284 = vstv %s283
        %v285 = vmul.f32 %v284, %v265
        %v286 = vadd.f32 %v282, %v285
        %s287 = sld [smem:[#allocation3 + $0x3]]
        %v288 = vstv %s287
        %v289 = vmul.f32 %v288, %v267
        %v290 = vadd.f32 %v286, %v289
        %s291 = sld [smem:[#allocation3 + $0x4]]
        %v292 = vstv %s291
        %v293 = vmul.f32 %v292, %v269
        %v294 = vadd.f32 %v290, %v293
        %s295 = sld [smem:[#allocation3 + $0x5]]
        %v296 = vstv %s295
        %v297 = vmul.f32 %v296, %v271
        %v298 = vadd.f32 %v294, %v297
        %s299 = sld [smem:[#allocation3 + $0x6]]
        %v300 = vstv %s299
        %v301 = vmul.f32 %v300, %v273
        %v302 = vadd.f32 %v298, %v301
        %s303 = sld [smem:[#allocation3 + $0x7]]
        %v304 = vstv %s303
        %v305 = vmul.f32 %v304, %v275
        %v306 = vadd.f32 %v302, %v305
        %vm307 = vcmask 261120
        %v308 = vsel %vm307, %v306, 0.0
        %s309 = sld [smem:[#allocation3 + $0x400]]
        %v310 = vstv %s309
        %v311 = vmul.f32 %v310, %v261
        %s312 = sld [smem:[#allocation3 + $0x401]]
        %v313 = vstv %s312
        %v314 = vmul.f32 %v313, %v263
        %v315 = vadd.f32 %v311, %v314
        %s316 = sld [smem:[#allocation3 + $0x402]]
        %v317 = vstv %s316
        %v318 = vmul.f32 %v317, %v265
        %v319 = vadd.f32 %v315, %v318
        %s320 = sld [smem:[#allocation3 + $0x403]]
        %v321 = vstv %s320
        %v322 = vmul.f32 %v321, %v267
        %v323 = vadd.f32 %v319, %v322
        %s324 = sld [smem:[#allocation3 + $0x404]]
        %v325 = vstv %s324
        %v326 = vmul.f32 %v325, %v269
        %v327 = vadd.f32 %v323, %v326
        %s328 = sld [smem:[#allocation3 + $0x405]]
        %v329 = vstv %s328
        %v330 = vmul.f32 %v329, %v271
        %v331 = vadd.f32 %v327, %v330
        %s332 = sld [smem:[#allocation3 + $0x406]]
        %v333 = vstv %s332
        %v334 = vmul.f32 %v333, %v273
        %v335 = vadd.f32 %v331, %v334
        %s336 = sld [smem:[#allocation3 + $0x407]]
        %v337 = vstv %s336
        %v338 = vmul.f32 %v337, %v275
        %v339 = vadd.f32 %v335, %v338
        %341 = vrot.lane.b32.xlu0 %v339, 1
        %v342 = vpop.permute.xlu0 %341
        %vm344 = vcmask 7168
        %v345 = vsel %vm344, 0.0, %v342
        %vm346 = vcmask 269312
        %v347 = vsel %vm346, %v345, 0.0
        %v348 = vadd.f32 %v308, %v347
        %s349 = sld [smem:[#allocation3 + $0x800]]
        %v350 = vstv %s349
        %v351 = vmul.f32 %v350, %v261
        %s352 = sld [smem:[#allocation3 + $0x801]]
        %v353 = vstv %s352
        %v354 = vmul.f32 %v353, %v263
        %v355 = vadd.f32 %v351, %v354
        %s356 = sld [smem:[#allocation3 + $0x802]]
        %v357 = vstv %s356
        %v358 = vmul.f32 %v357, %v265
        %v359 = vadd.f32 %v355, %v358
        %s360 = sld [smem:[#allocation3 + $0x803]]
        %v361 = vstv %s360
        %v362 = vmul.f32 %v361, %v267
        %v363 = vadd.f32 %v359, %v362
        %s364 = sld [smem:[#allocation3 + $0x804]]
        %v365 = vstv %s364
        %v366 = vmul.f32 %v365, %v269
        %v367 = vadd.f32 %v363, %v366
        %s368 = sld [smem:[#allocation3 + $0x805]]
        %v369 = vstv %s368
        %v370 = vmul.f32 %v369, %v271
        %v371 = vadd.f32 %v367, %v370
        %s372 = sld [smem:[#allocation3 + $0x806]]
        %v373 = vstv %s372
        %v374 = vmul.f32 %v373, %v273
        %v375 = vadd.f32 %v371, %v374
        %s376 = sld [smem:[#allocation3 + $0x807]]
        %v377 = vstv %s376
        %v378 = vmul.f32 %v377, %v275
        %v379 = vadd.f32 %v375, %v378
        %381 = vrot.lane.b32.xlu0 %v379, 2
        %v382 = vpop.permute.xlu0 %381
        %vm384 = vcmask 15360
        %v385 = vsel %vm384, 0.0, %v382
        %v386 = vadd.f32 %v348, %v385
        %s387 = sld [smem:[#allocation6]]
        %v388 = vstv %s387
        %v389 = vadd.f32 %v386, %v388
        %s390 = sld [smem:[#allocation3 + $0x200]]
        %v391 = vstv %s390
        %v392 = vmul.f32 %v391, %v261
        %s393 = sld [smem:[#allocation3 + $0x201]]
        %v394 = vstv %s393
        %v395 = vmul.f32 %v394, %v263
        %v396 = vadd.f32 %v392, %v395
        %s397 = sld [smem:[#allocation3 + $0x202]]
        %v398 = vstv %s397
        %v399 = vmul.f32 %v398, %v265
        %v400 = vadd.f32 %v396, %v399
        %s401 = sld [smem:[#allocation3 + $0x203]]
        %v402 = vstv %s401
        %v403 = vmul.f32 %v402, %v267
        %v404 = vadd.f32 %v400, %v403
        %s405 = sld [smem:[#allocation3 + $0x204]]
        %v406 = vstv %s405
        %v407 = vmul.f32 %v406, %v269
        %v408 = vadd.f32 %v404, %v407
        %s409 = sld [smem:[#allocation3 + $0x205]]
        %v410 = vstv %s409
        %v411 = vmul.f32 %v410, %v271
        %v412 = vadd.f32 %v408, %v411
        %s413 = sld [smem:[#allocation3 + $0x206]]
        %v414 = vstv %s413
        %v415 = vmul.f32 %v414, %v273
        %v416 = vadd.f32 %v412, %v415
        %s417 = sld [smem:[#allocation3 + $0x207]]
        %v418 = vstv %s417
        %v419 = vmul.f32 %v418, %v275
        %v420 = vadd.f32 %v416, %v419
        %v421 = vsel %vm307, %v420, 0.0
        %s422 = sld [smem:[#allocation3 + $0x600]]
        %v423 = vstv %s422
        %v424 = vmul.f32 %v423, %v261
        %s425 = sld [smem:[#allocation3 + $0x601]]
        %v426 = vstv %s425
        %v427 = vmul.f32 %v426, %v263
        %v428 = vadd.f32 %v424, %v427
        %s429 = sld [smem:[#allocation3 + $0x602]]
        %v430 = vstv %s429
        %v431 = vmul.f32 %v430, %v265
        %v432 = vadd.f32 %v428, %v431
        %s433 = sld [smem:[#allocation3 + $0x603]]
        %v434 = vstv %s433
        %v435 = vmul.f32 %v434, %v267
        %v436 = vadd.f32 %v432, %v435
        %s437 = sld [smem:[#allocation3 + $0x604]]
        %v438 = vstv %s437
        %v439 = vmul.f32 %v438, %v269
        %v440 = vadd.f32 %v436, %v439
        %s441 = sld [smem:[#allocation3 + $0x605]]
        %v442 = vstv %s441
        %v443 = vmul.f32 %v442, %v271
        %v444 = vadd.f32 %v440, %v443
        %s445 = sld [smem:[#allocation3 + $0x606]]
        %v446 = vstv %s445
        %v447 = vmul.f32 %v446, %v273
        %v448 = vadd.f32 %v444, %v447
        %s449 = sld [smem:[#allocation3 + $0x607]]
        %v450 = vstv %s449
        %v451 = vmul.f32 %v450, %v275
        %v452 = vadd.f32 %v448, %v451
        %454 = vrot.lane.b32.xlu0 %v452, 1
        %v455 = vpop.permute.xlu0 %454
        %v457 = vsel %vm344, 0.0, %v455
        %v458 = vsel %vm346, %v457, 0.0
        %v459 = vadd.f32 %v421, %v458
        %s460 = sld [smem:[#allocation3 + $0xa00]]
        %v461 = vstv %s460
        %v462 = vmul.f32 %v461, %v261
        %s463 = sld [smem:[#allocation3 + $0xa01]]
        %v464 = vstv %s463
        %v465 = vmul.f32 %v464, %v263
        %v466 = vadd.f32 %v462, %v465
        %s467 = sld [smem:[#allocation3 + $0xa02]]
        %v468 = vstv %s467
        %v469 = vmul.f32 %v468, %v265
        %v470 = vadd.f32 %v466, %v469
        %s471 = sld [smem:[#allocation3 + $0xa03]]
        %v472 = vstv %s471
        %v473 = vmul.f32 %v472, %v267
        %v474 = vadd.f32 %v470, %v473
        %s475 = sld [smem:[#allocation3 + $0xa04]]
        %v476 = vstv %s475
        %v477 = vmul.f32 %v476, %v269
        %v478 = vadd.f32 %v474, %v477
        %s479 = sld [smem:[#allocation3 + $0xa05]]
        %v480 = vstv %s479
        %v481 = vmul.f32 %v480, %v271
        %v482 = vadd.f32 %v478, %v481
        %s483 = sld [smem:[#allocation3 + $0xa06]]
        %v484 = vstv %s483
        %v485 = vmul.f32 %v484, %v273
        %v486 = vadd.f32 %v482, %v485
        %s487 = sld [smem:[#allocation3 + $0xa07]]
        %v488 = vstv %s487
        %v489 = vmul.f32 %v488, %v275
        %v490 = vadd.f32 %v486, %v489
        %492 = vrot.lane.b32.xlu0 %v490, 2
        %v493 = vpop.permute.xlu0 %492
        %v495 = vsel %vm384, 0.0, %v493
        %v496 = vadd.f32 %v459, %v495
        %s497 = sld [smem:[#allocation6 + $0x4]]
        %v498 = vstv %s497
        %v499 = vadd.f32 %v496, %v498
        %v500 = vxor.u32 %v499, 2147483648
        %v501 = vmul.f32 %v500, 1.442695
        %v502 = vpow.pop %v501
        %v503 = vadd.f32 %v502, 1.0
        %v504 = vrcp.pop %v503
        %v505 = vmul.f32 1.0, %v504
        %v506 = vmul.f32 %v389, %v505
        %507 = vst.msk [vmem:[%s260] sm:$0xff] %vm346, %v506
        %s508 = sld [smem:[#allocation3 + $0x80]]
        %v509 = vstv %s508
        %v510 = vmul.f32 %v509, %v261
        %s511 = sld [smem:[#allocation3 + $0x81]]
        %v512 = vstv %s511
        %v513 = vmul.f32 %v512, %v263
        %v514 = vadd.f32 %v510, %v513
        %s515 = sld [smem:[#allocation3 + $0x82]]
        %v516 = vstv %s515
        %v517 = vmul.f32 %v516, %v265
        %v518 = vadd.f32 %v514, %v517
        %s519 = sld [smem:[#allocation3 + $0x83]]
        %v520 = vstv %s519
        %v521 = vmul.f32 %v520, %v267
        %v522 = vadd.f32 %v518, %v521
        %s523 = sld [smem:[#allocation3 + $0x84]]
        %v524 = vstv %s523
        %v525 = vmul.f32 %v524, %v269
        %v526 = vadd.f32 %v522, %v525
        %s527 = sld [smem:[#allocation3 + $0x85]]
        %v528 = vstv %s527
        %v529 = vmul.f32 %v528, %v271
        %v530 = vadd.f32 %v526, %v529
        %s531 = sld [smem:[#allocation3 + $0x86]]
        %v532 = vstv %s531
        %v533 = vmul.f32 %v532, %v273
        %v534 = vadd.f32 %v530, %v533
        %s535 = sld [smem:[#allocation3 + $0x87]]
        %v536 = vstv %s535
        %v537 = vmul.f32 %v536, %v275
        %v538 = vadd.f32 %v534, %v537
        %v539 = vsel %vm307, %v538, 0.0
        %s540 = sld [smem:[#allocation3 + $0x480]]
        %v541 = vstv %s540
        %v542 = vmul.f32 %v541, %v261
        %s543 = sld [smem:[#allocation3 + $0x481]]
        %v544 = vstv %s543
        %v545 = vmul.f32 %v544, %v263
        %v546 = vadd.f32 %v542, %v545
        %s547 = sld [smem:[#allocation3 + $0x482]]
        %v548 = vstv %s547
        %v549 = vmul.f32 %v548, %v265
        %v550 = vadd.f32 %v546, %v549
        %s551 = sld [smem:[#allocation3 + $0x483]]
        %v552 = vstv %s551
        %v553 = vmul.f32 %v552, %v267
        %v554 = vadd.f32 %v550, %v553
        %s555 = sld [smem:[#allocation3 + $0x484]]
        %v556 = vstv %s555
        %v557 = vmul.f32 %v556, %v269
        %v558 = vadd.f32 %v554, %v557
        %s559 = sld [smem:[#allocation3 + $0x485]]
        %v560 = vstv %s559
        %v561 = vmul.f32 %v560, %v271
        %v562 = vadd.f32 %v558, %v561
        %s563 = sld [smem:[#allocation3 + $0x486]]
        %v564 = vstv %s563
        %v565 = vmul.f32 %v564, %v273
        %v566 = vadd.f32 %v562, %v565
        %s567 = sld [smem:[#allocation3 + $0x487]]
        %v568 = vstv %s567
        %v569 = vmul.f32 %v568, %v275
        %v570 = vadd.f32 %v566, %v569
        %572 = vrot.lane.b32.xlu0 %v570, 1
        %v573 = vpop.permute.xlu0 %572
        %v575 = vsel %vm344, 0.0, %v573
        %v576 = vsel %vm346, %v575, 0.0
        %v577 = vadd.f32 %v539, %v576
        %s578 = sld [smem:[#allocation3 + $0x880]]
        %v579 = vstv %s578
        %v580 = vmul.f32 %v579, %v261
        %s581 = sld [smem:[#allocation3 + $0x881]]
        %v582 = vstv %s581
        %v583 = vmul.f32 %v582, %v263
        %v584 = vadd.f32 %v580, %v583
        %s585 = sld [smem:[#allocation3 + $0x882]]
        %v586 = vstv %s585
        %v587 = vmul.f32 %v586, %v265
        %v588 = vadd.f32 %v584, %v587
        %s589 = sld [smem:[#allocation3 + $0x883]]
        %v590 = vstv %s589
        %v591 = vmul.f32 %v590, %v267
        %v592 = vadd.f32 %v588, %v591
        %s593 = sld [smem:[#allocation3 + $0x884]]
        %v594 = vstv %s593
        %v595 = vmul.f32 %v594, %v269
        %v596 = vadd.f32 %v592, %v595
        %s597 = sld [smem:[#allocation3 + $0x885]]
        %v598 = vstv %s597
        %v599 = vmul.f32 %v598, %v271
        %v600 = vadd.f32 %v596, %v599
        %s601 = sld [smem:[#allocation3 + $0x886]]
        %v602 = vstv %s601
        %v603 = vmul.f32 %v602, %v273
        %v604 = vadd.f32 %v600, %v603
        %s605 = sld [smem:[#allocation3 + $0x887]]
        %v606 = vstv %s605
        %v607 = vmul.f32 %v606, %v275
        %v608 = vadd.f32 %v604, %v607
        %610 = vrot.lane.b32.xlu0 %v608, 2
        %v611 = vpop.permute.xlu0 %610
        %v613 = vsel %vm384, 0.0, %v611
        %v614 = vadd.f32 %v577, %v613
        %s615 = sld [smem:[#allocation6 + $0x1]]
        %v616 = vstv %s615
        %v617 = vadd.f32 %v614, %v616
        %s618 = sld [smem:[#allocation3 + $0x280]]
        %v619 = vstv %s618
        %v620 = vmul.f32 %v619, %v261
        %s621 = sld [smem:[#allocation3 + $0x281]]
        %v622 = vstv %s621
        %v623 = vmul.f32 %v622, %v263
        %v624 = vadd.f32 %v620, %v623
        %s625 = sld [smem:[#allocation3 + $0x282]]
        %v626 = vstv %s625
        %v627 = vmul.f32 %v626, %v265
        %v628 = vadd.f32 %v624, %v627
        %s629 = sld [smem:[#allocation3 + $0x283]]
        %v630 = vstv %s629
        %v631 = vmul.f32 %v630, %v267
        %v632 = vadd.f32 %v628, %v631
        %s633 = sld [smem:[#allocation3 + $0x284]]
        %v634 = vstv %s633
        %v635 = vmul.f32 %v634, %v269
        %v636 = vadd.f32 %v632, %v635
        %s637 = sld [smem:[#allocation3 + $0x285]]
        %v638 = vstv %s637
        %v639 = vmul.f32 %v638, %v271
        %v640 = vadd.f32 %v636, %v639
        %s641 = sld [smem:[#allocation3 + $0x286]]
        %v642 = vstv %s641
        %v643 = vmul.f32 %v642, %v273
        %v644 = vadd.f32 %v640, %v643
        %s645 = sld [smem:[#allocation3 + $0x287]]
        %v646 = vstv %s645
        %v647 = vmul.f32 %v646, %v275
        %v648 = vadd.f32 %v644, %v647
        %v649 = vsel %vm307, %v648, 0.0
        %s650 = sld [smem:[#allocation3 + $0x680]]
        %v651 = vstv %s650
        %v652 = vmul.f32 %v651, %v261
        %s653 = sld [smem:[#allocation3 + $0x681]]
        %v654 = vstv %s653
        %v655 = vmul.f32 %v654, %v263
        %v656 = vadd.f32 %v652, %v655
        %s657 = sld [smem:[#allocation3 + $0x682]]
        %v658 = vstv %s657
        %v659 = vmul.f32 %v658, %v265
        %v660 = vadd.f32 %v656, %v659
        %s661 = sld [smem:[#allocation3 + $0x683]]
        %v662 = vstv %s661
        %v663 = vmul.f32 %v662, %v267
        %v664 = vadd.f32 %v660, %v663
        %s665 = sld [smem:[#allocation3 + $0x684]]
        %v666 = vstv %s665
        %v667 = vmul.f32 %v666, %v269
        %v668 = vadd.f32 %v664, %v667
        %s669 = sld [smem:[#allocation3 + $0x685]]
        %v670 = vstv %s669
        %v671 = vmul.f32 %v670, %v271
        %v672 = vadd.f32 %v668, %v671
        %s673 = sld [smem:[#allocation3 + $0x686]]
        %v674 = vstv %s673
        %v675 = vmul.f32 %v674, %v273
        %v676 = vadd.f32 %v672, %v675
        %s677 = sld [smem:[#allocation3 + $0x687]]
        %v678 = vstv %s677
        %v679 = vmul.f32 %v678, %v275
        %v680 = vadd.f32 %v676, %v679
        %682 = vrot.lane.b32.xlu0 %v680, 1
        %v683 = vpop.permute.xlu0 %682
        %v685 = vsel %vm344, 0.0, %v683
        %v686 = vsel %vm346, %v685, 0.0
        %v687 = vadd.f32 %v649, %v686
        %s688 = sld [smem:[#allocation3 + $0xa80]]
        %v689 = vstv %s688
        %v690 = vmul.f32 %v689, %v261
        %s691 = sld [smem:[#allocation3 + $0xa81]]
        %v692 = vstv %s691
        %v693 = vmul.f32 %v692, %v263
        %v694 = vadd.f32 %v690, %v693
        %s695 = sld [smem:[#allocation3 + $0xa82]]
        %v696 = vstv %s695
        %v697 = vmul.f32 %v696, %v265
        %v698 = vadd.f32 %v694, %v697
        %s699 = sld [smem:[#allocation3 + $0xa83]]
        %v700 = vstv %s699
        %v701 = vmul.f32 %v700, %v267
        %v702 = vadd.f32 %v698, %v701
        %s703 = sld [smem:[#allocation3 + $0xa84]]
        %v704 = vstv %s703
        %v705 = vmul.f32 %v704, %v269
        %v706 = vadd.f32 %v702, %v705
        %s707 = sld [smem:[#allocation3 + $0xa85]]
        %v708 = vstv %s707
        %v709 = vmul.f32 %v708, %v271
        %v710 = vadd.f32 %v706, %v709
        %s711 = sld [smem:[#allocation3 + $0xa86]]
        %v712 = vstv %s711
        %v713 = vmul.f32 %v712, %v273
        %v714 = vadd.f32 %v710, %v713
        %s715 = sld [smem:[#allocation3 + $0xa87]]
        %v716 = vstv %s715
        %v717 = vmul.f32 %v716, %v275
        %v718 = vadd.f32 %v714, %v717
        %720 = vrot.lane.b32.xlu0 %v718, 2
        %v721 = vpop.permute.xlu0 %720
        %v723 = vsel %vm384, 0.0, %v721
        %v724 = vadd.f32 %v687, %v723
        %s725 = sld [smem:[#allocation6 + $0x5]]
        %v726 = vstv %s725
        %v727 = vadd.f32 %v724, %v726
        %v728 = vxor.u32 %v727, 2147483648
        %v729 = vmul.f32 %v728, 1.442695
        %v730 = vpow.pop %v729
        %v731 = vadd.f32 %v730, 1.0
        %v732 = vrcp.pop %v731
        %v733 = vmul.f32 1.0, %v732
        %v734 = vmul.f32 %v617, %v733
        %s735 = scalar_lea.vmem %s260, 8 [#allocation8]
        %736 = vst.msk [vmem:[%s735] sm:$0xff] %vm346, %v734
        %s737 = sld [smem:[#allocation3 + $0x100]]
        %v738 = vstv %s737
        %v739 = vmul.f32 %v738, %v261
        %s740 = sld [smem:[#allocation3 + $0x101]]
        %v741 = vstv %s740
        %v742 = vmul.f32 %v741, %v263
        %v743 = vadd.f32 %v739, %v742
        %s744 = sld [smem:[#allocation3 + $0x102]]
        %v745 = vstv %s744
        %v746 = vmul.f32 %v745, %v265
        %v747 = vadd.f32 %v743, %v746
        %s748 = sld [smem:[#allocation3 + $0x103]]
        %v749 = vstv %s748
        %v750 = vmul.f32 %v749, %v267
        %v751 = vadd.f32 %v747, %v750
        %s752 = sld [smem:[#allocation3 + $0x104]]
        %v753 = vstv %s752
        %v754 = vmul.f32 %v753, %v269
        %v755 = vadd.f32 %v751, %v754
        %s756 = sld [smem:[#allocation3 + $0x105]]
        %v757 = vstv %s756
        %v758 = vmul.f32 %v757, %v271
        %v759 = vadd.f32 %v755, %v758
        %s760 = sld [smem:[#allocation3 + $0x106]]
        %v761 = vstv %s760
        %v762 = vmul.f32 %v761, %v273
        %v763 = vadd.f32 %v759, %v762
        %s764 = sld [smem:[#allocation3 + $0x107]]
        %v765 = vstv %s764
        %v766 = vmul.f32 %v765, %v275
        %v767 = vadd.f32 %v763, %v766
        %v768 = vsel %vm307, %v767, 0.0
        %s769 = sld [smem:[#allocation3 + $0x500]]
        %v770 = vstv %s769
        %v771 = vmul.f32 %v770, %v261
        %s772 = sld [smem:[#allocation3 + $0x501]]
        %v773 = vstv %s772
        %v774 = vmul.f32 %v773, %v263
        %v775 = vadd.f32 %v771, %v774
        %s776 = sld [smem:[#allocation3 + $0x502]]
        %v777 = vstv %s776
        %v778 = vmul.f32 %v777, %v265
        %v779 = vadd.f32 %v775, %v778
        %s780 = sld [smem:[#allocation3 + $0x503]]
        %v781 = vstv %s780
        %v782 = vmul.f32 %v781, %v267
        %v783 = vadd.f32 %v779, %v782
        %s784 = sld [smem:[#allocation3 + $0x504]]
        %v785 = vstv %s784
        %v786 = vmul.f32 %v785, %v269
        %v787 = vadd.f32 %v783, %v786
        %s788 = sld [smem:[#allocation3 + $0x505]]
        %v789 = vstv %s788
        %v790 = vmul.f32 %v789, %v271
        %v791 = vadd.f32 %v787, %v790
        %s792 = sld [smem:[#allocation3 + $0x506]]
        %v793 = vstv %s792
        %v794 = vmul.f32 %v793, %v273
        %v795 = vadd.f32 %v791, %v794
        %s796 = sld [smem:[#allocation3 + $0x507]]
        %v797 = vstv %s796
        %v798 = vmul.f32 %v797, %v275
        %v799 = vadd.f32 %v795, %v798
        %801 = vrot.lane.b32.xlu0 %v799, 1
        %v802 = vpop.permute.xlu0 %801
        %v804 = vsel %vm344, 0.0, %v802
        %v805 = vsel %vm346, %v804, 0.0
        %v806 = vadd.f32 %v768, %v805
        %s807 = sld [smem:[#allocation3 + $0x900]]
        %v808 = vstv %s807
        %v809 = vmul.f32 %v808, %v261
        %s810 = sld [smem:[#allocation3 + $0x901]]
        %v811 = vstv %s810
        %v812 = vmul.f32 %v811, %v263
        %v813 = vadd.f32 %v809, %v812
        %s814 = sld [smem:[#allocation3 + $0x902]]
        %v815 = vstv %s814
        %v816 = vmul.f32 %v815, %v265
        %v817 = vadd.f32 %v813, %v816
        %s818 = sld [smem:[#allocation3 + $0x903]]
        %v819 = vstv %s818
        %v820 = vmul.f32 %v819, %v267
        %v821 = vadd.f32 %v817, %v820
        %s822 = sld [smem:[#allocation3 + $0x904]]
        %v823 = vstv %s822
        %v824 = vmul.f32 %v823, %v269
        %v825 = vadd.f32 %v821, %v824
        %s826 = sld [smem:[#allocation3 + $0x905]]
        %v827 = vstv %s826
        %v828 = vmul.f32 %v827, %v271
        %v829 = vadd.f32 %v825, %v828
        %s830 = sld [smem:[#allocation3 + $0x906]]
        %v831 = vstv %s830
        %v832 = vmul.f32 %v831, %v273
        %v833 = vadd.f32 %v829, %v832
        %s834 = sld [smem:[#allocation3 + $0x907]]
        %v835 = vstv %s834
        %v836 = vmul.f32 %v835, %v275
        %v837 = vadd.f32 %v833, %v836
        %839 = vrot.lane.b32.xlu0 %v837, 2
        %v840 = vpop.permute.xlu0 %839
        %v842 = vsel %vm384, 0.0, %v840
        %v843 = vadd.f32 %v806, %v842
        %s844 = sld [smem:[#allocation6 + $0x2]]
        %v845 = vstv %s844
        %v846 = vadd.f32 %v843, %v845
        %s847 = sld [smem:[#allocation3 + $0x300]]
        %v848 = vstv %s847
        %v849 = vmul.f32 %v848, %v261
        %s850 = sld [smem:[#allocation3 + $0x301]]
        %v851 = vstv %s850
        %v852 = vmul.f32 %v851, %v263
        %v853 = vadd.f32 %v849, %v852
        %s854 = sld [smem:[#allocation3 + $0x302]]
        %v855 = vstv %s854
        %v856 = vmul.f32 %v855, %v265
        %v857 = vadd.f32 %v853, %v856
        %s858 = sld [smem:[#allocation3 + $0x303]]
        %v859 = vstv %s858
        %v860 = vmul.f32 %v859, %v267
        %v861 = vadd.f32 %v857, %v860
        %s862 = sld [smem:[#allocation3 + $0x304]]
        %v863 = vstv %s862
        %v864 = vmul.f32 %v863, %v269
        %v865 = vadd.f32 %v861, %v864
        %s866 = sld [smem:[#allocation3 + $0x305]]
        %v867 = vstv %s866
        %v868 = vmul.f32 %v867, %v271
        %v869 = vadd.f32 %v865, %v868
        %s870 = sld [smem:[#allocation3 + $0x306]]
        %v871 = vstv %s870
        %v872 = vmul.f32 %v871, %v273
        %v873 = vadd.f32 %v869, %v872
        %s874 = sld [smem:[#allocation3 + $0x307]]
        %v875 = vstv %s874
        %v876 = vmul.f32 %v875, %v275
        %v877 = vadd.f32 %v873, %v876
        %v878 = vsel %vm307, %v877, 0.0
        %s879 = sld [smem:[#allocation3 + $0x700]]
        %v880 = vstv %s879
        %v881 = vmul.f32 %v880, %v261
        %s882 = sld [smem:[#allocation3 + $0x701]]
        %v883 = vstv %s882
        %v884 = vmul.f32 %v883, %v263
        %v885 = vadd.f32 %v881, %v884
        %s886 = sld [smem:[#allocation3 + $0x702]]
        %v887 = vstv %s886
        %v888 = vmul.f32 %v887, %v265
        %v889 = vadd.f32 %v885, %v888
        %s890 = sld [smem:[#allocation3 + $0x703]]
        %v891 = vstv %s890
        %v892 = vmul.f32 %v891, %v267
        %v893 = vadd.f32 %v889, %v892
        %s894 = sld [smem:[#allocation3 + $0x704]]
        %v895 = vstv %s894
        %v896 = vmul.f32 %v895, %v269
        %v897 = vadd.f32 %v893, %v896
        %s898 = sld [smem:[#allocation3 + $0x705]]
        %v899 = vstv %s898
        %v900 = vmul.f32 %v899, %v271
        %v901 = vadd.f32 %v897, %v900
        %s902 = sld [smem:[#allocation3 + $0x706]]
        %v903 = vstv %s902
        %v904 = vmul.f32 %v903, %v273
        %v905 = vadd.f32 %v901, %v904
        %s906 = sld [smem:[#allocation3 + $0x707]]
        %v907 = vstv %s906
        %v908 = vmul.f32 %v907, %v275
        %v909 = vadd.f32 %v905, %v908
        %911 = vrot.lane.b32.xlu0 %v909, 1
        %v912 = vpop.permute.xlu0 %911
        %v914 = vsel %vm344, 0.0, %v912
        %v915 = vsel %vm346, %v914, 0.0
        %v916 = vadd.f32 %v878, %v915
        %s917 = sld [smem:[#allocation3 + $0xb00]]
        %v918 = vstv %s917
        %v919 = vmul.f32 %v918, %v261
        %s920 = sld [smem:[#allocation3 + $0xb01]]
        %v921 = vstv %s920
        %v922 = vmul.f32 %v921, %v263
        %v923 = vadd.f32 %v919, %v922
        %s924 = sld [smem:[#allocation3 + $0xb02]]
        %v925 = vstv %s924
        %v926 = vmul.f32 %v925, %v265
        %v927 = vadd.f32 %v923, %v926
        %s928 = sld [smem:[#allocation3 + $0xb03]]
        %v929 = vstv %s928
        %v930 = vmul.f32 %v929, %v267
        %v931 = vadd.f32 %v927, %v930
        %s932 = sld [smem:[#allocation3 + $0xb04]]
        %v933 = vstv %s932
        %v934 = vmul.f32 %v933, %v269
        %v935 = vadd.f32 %v931, %v934
        %s936 = sld [smem:[#allocation3 + $0xb05]]
        %v937 = vstv %s936
        %v938 = vmul.f32 %v937, %v271
        %v939 = vadd.f32 %v935, %v938
        %s940 = sld [smem:[#allocation3 + $0xb06]]
        %v941 = vstv %s940
        %v942 = vmul.f32 %v941, %v273
        %v943 = vadd.f32 %v939, %v942
        %s944 = sld [smem:[#allocation3 + $0xb07]]
        %v945 = vstv %s944
        %v946 = vmul.f32 %v945, %v275
        %v947 = vadd.f32 %v943, %v946
        %949 = vrot.lane.b32.xlu0 %v947, 2
        %v950 = vpop.permute.xlu0 %949
        %v952 = vsel %vm384, 0.0, %v950
        %v953 = vadd.f32 %v916, %v952
        %s954 = sld [smem:[#allocation6 + $0x6]]
        %v955 = vstv %s954
        %v956 = vadd.f32 %v953, %v955
        %v957 = vxor.u32 %v956, 2147483648
        %v958 = vmul.f32 %v957, 1.442695
        %v959 = vpow.pop %v958
        %v960 = vadd.f32 %v959, 1.0
        %v961 = vrcp.pop %v960
        %v962 = vmul.f32 1.0, %v961
        %v963 = vmul.f32 %v846, %v962
        %s964 = scalar_lea.vmem %s260, 16 [#allocation8]
        %965 = vst.msk [vmem:[%s964] sm:$0xff] %vm346, %v963
        %s966 = sld [smem:[#allocation3 + $0x180]]
        %v967 = vstv %s966
        %v968 = vmul.f32 %v967, %v261
        %s969 = sld [smem:[#allocation3 + $0x181]]
        %v970 = vstv %s969
        %v971 = vmul.f32 %v970, %v263
        %v972 = vadd.f32 %v968, %v971
        %s973 = sld [smem:[#allocation3 + $0x182]]
        %v974 = vstv %s973
        %v975 = vmul.f32 %v974, %v265
        %v976 = vadd.f32 %v972, %v975
        %s977 = sld [smem:[#allocation3 + $0x183]]
        %v978 = vstv %s977
        %v979 = vmul.f32 %v978, %v267
        %v980 = vadd.f32 %v976, %v979
        %s981 = sld [smem:[#allocation3 + $0x184]]
        %v982 = vstv %s981
        %v983 = vmul.f32 %v982, %v269
        %v984 = vadd.f32 %v980, %v983
        %s985 = sld [smem:[#allocation3 + $0x185]]
        %v986 = vstv %s985
        %v987 = vmul.f32 %v986, %v271
        %v988 = vadd.f32 %v984, %v987
        %s989 = sld [smem:[#allocation3 + $0x186]]
        %v990 = vstv %s989
        %v991 = vmul.f32 %v990, %v273
        %v992 = vadd.f32 %v988, %v991
        %s993 = sld [smem:[#allocation3 + $0x187]]
        %v994 = vstv %s993
        %v995 = vmul.f32 %v994, %v275
        %v996 = vadd.f32 %v992, %v995
        %v997 = vsel %vm307, %v996, 0.0
        %s998 = sld [smem:[#allocation3 + $0x580]]
        %v999 = vstv %s998
        %v1000 = vmul.f32 %v999, %v261
        %s1001 = sld [smem:[#allocation3 + $0x581]]
        %v1002 = vstv %s1001
        %v1003 = vmul.f32 %v1002, %v263
        %v1004 = vadd.f32 %v1000, %v1003
        %s1005 = sld [smem:[#allocation3 + $0x582]]
        %v1006 = vstv %s1005
        %v1007 = vmul.f32 %v1006, %v265
        %v1008 = vadd.f32 %v1004, %v1007
        %s1009 = sld [smem:[#allocation3 + $0x583]]
        %v1010 = vstv %s1009
        %v1011 = vmul.f32 %v1010, %v267
        %v1012 = vadd.f32 %v1008, %v1011
        %s1013 = sld [smem:[#allocation3 + $0x584]]
        %v1014 = vstv %s1013
        %v1015 = vmul.f32 %v1014, %v269
        %v1016 = vadd.f32 %v1012, %v1015
        %s1017 = sld [smem:[#allocation3 + $0x585]]
        %v1018 = vstv %s1017
        %v1019 = vmul.f32 %v1018, %v271
        %v1020 = vadd.f32 %v1016, %v1019
        %s1021 = sld [smem:[#allocation3 + $0x586]]
        %v1022 = vstv %s1021
        %v1023 = vmul.f32 %v1022, %v273
        %v1024 = vadd.f32 %v1020, %v1023
        %s1025 = sld [smem:[#allocation3 + $0x587]]
        %v1026 = vstv %s1025
        %v1027 = vmul.f32 %v1026, %v275
        %v1028 = vadd.f32 %v1024, %v1027
        %1030 = vrot.lane.b32.xlu0 %v1028, 1
        %v1031 = vpop.permute.xlu0 %1030
        %v1033 = vsel %vm344, 0.0, %v1031
        %v1034 = vsel %vm346, %v1033, 0.0
        %v1035 = vadd.f32 %v997, %v1034
        %s1036 = sld [smem:[#allocation3 + $0x980]]
        %v1037 = vstv %s1036
        %v1038 = vmul.f32 %v1037, %v261
        %s1039 = sld [smem:[#allocation3 + $0x981]]
        %v1040 = vstv %s1039
        %v1041 = vmul.f32 %v1040, %v263
        %v1042 = vadd.f32 %v1038, %v1041
        %s1043 = sld [smem:[#allocation3 + $0x982]]
        %v1044 = vstv %s1043
        %v1045 = vmul.f32 %v1044, %v265
        %v1046 = vadd.f32 %v1042, %v1045
        %s1047 = sld [smem:[#allocation3 + $0x983]]
        %v1048 = vstv %s1047
        %v1049 = vmul.f32 %v1048, %v267
        %v1050 = vadd.f32 %v1046, %v1049
        %s1051 = sld [smem:[#allocation3 + $0x984]]
        %v1052 = vstv %s1051
        %v1053 = vmul.f32 %v1052, %v269
        %v1054 = vadd.f32 %v1050, %v1053
        %s1055 = sld [smem:[#allocation3 + $0x985]]
        %v1056 = vstv %s1055
        %v1057 = vmul.f32 %v1056, %v271
        %v1058 = vadd.f32 %v1054, %v1057
        %s1059 = sld [smem:[#allocation3 + $0x986]]
        %v1060 = vstv %s1059
        %v1061 = vmul.f32 %v1060, %v273
        %v1062 = vadd.f32 %v1058, %v1061
        %s1063 = sld [smem:[#allocation3 + $0x987]]
        %v1064 = vstv %s1063
        %v1065 = vmul.f32 %v1064, %v275
        %v1066 = vadd.f32 %v1062, %v1065
        %1068 = vrot.lane.b32.xlu0 %v1066, 2
        %v1069 = vpop.permute.xlu0 %1068
        %v1071 = vsel %vm384, 0.0, %v1069
        %v1072 = vadd.f32 %v1035, %v1071
        %s1073 = sld [smem:[#allocation6 + $0x3]]
        %v1074 = vstv %s1073
        %v1075 = vadd.f32 %v1072, %v1074
        %s1076 = sld [smem:[#allocation3 + $0x380]]
        %v1077 = vstv %s1076
        %v1078 = vmul.f32 %v1077, %v261
        %s1079 = sld [smem:[#allocation3 + $0x381]]
        %v1080 = vstv %s1079
        %v1081 = vmul.f32 %v1080, %v263
        %v1082 = vadd.f32 %v1078, %v1081
        %s1083 = sld [smem:[#allocation3 + $0x382]]
        %v1084 = vstv %s1083
        %v1085 = vmul.f32 %v1084, %v265
        %v1086 = vadd.f32 %v1082, %v1085
        %s1087 = sld [smem:[#allocation3 + $0x383]]
        %v1088 = vstv %s1087
        %v1089 = vmul.f32 %v1088, %v267
        %v1090 = vadd.f32 %v1086, %v1089
        %s1091 = sld [smem:[#allocation3 + $0x384]]
        %v1092 = vstv %s1091
        %v1093 = vmul.f32 %v1092, %v269
        %v1094 = vadd.f32 %v1090, %v1093
        %s1095 = sld [smem:[#allocation3 + $0x385]]
        %v1096 = vstv %s1095
        %v1097 = vmul.f32 %v1096, %v271
        %v1098 = vadd.f32 %v1094, %v1097
        %s1099 = sld [smem:[#allocation3 + $0x386]]
        %v1100 = vstv %s1099
        %v1101 = vmul.f32 %v1100, %v273
        %v1102 = vadd.f32 %v1098, %v1101
        %s1103 = sld [smem:[#allocation3 + $0x387]]
        %v1104 = vstv %s1103
        %v1105 = vmul.f32 %v1104, %v275
        %v1106 = vadd.f32 %v1102, %v1105
        %v1107 = vsel %vm307, %v1106, 0.0
        %s1108 = sld [smem:[#allocation3 + $0x780]]
        %v1109 = vstv %s1108
        %v1110 = vmul.f32 %v1109, %v261
        %s1111 = sld [smem:[#allocation3 + $0x781]]
        %v1112 = vstv %s1111
        %v1113 = vmul.f32 %v1112, %v263
        %v1114 = vadd.f32 %v1110, %v1113
        %s1115 = sld [smem:[#allocation3 + $0x782]]
        %v1116 = vstv %s1115
        %v1117 = vmul.f32 %v1116, %v265
        %v1118 = vadd.f32 %v1114, %v1117
        %s1119 = sld [smem:[#allocation3 + $0x783]]
        %v1120 = vstv %s1119
        %v1121 = vmul.f32 %v1120, %v267
        %v1122 = vadd.f32 %v1118, %v1121
        %s1123 = sld [smem:[#allocation3 + $0x784]]
        %v1124 = vstv %s1123
        %v1125 = vmul.f32 %v1124, %v269
        %v1126 = vadd.f32 %v1122, %v1125
        %s1127 = sld [smem:[#allocation3 + $0x785]]
        %v1128 = vstv %s1127
        %v1129 = vmul.f32 %v1128, %v271
        %v1130 = vadd.f32 %v1126, %v1129
        %s1131 = sld [smem:[#allocation3 + $0x786]]
        %v1132 = vstv %s1131
        %v1133 = vmul.f32 %v1132, %v273
        %v1134 = vadd.f32 %v1130, %v1133
        %s1135 = sld [smem:[#allocation3 + $0x787]]
        %v1136 = vstv %s1135
        %v1137 = vmul.f32 %v1136, %v275
        %v1138 = vadd.f32 %v1134, %v1137
        %1140 = vrot.lane.b32.xlu0 %v1138, 1
        %v1141 = vpop.permute.xlu0 %1140
        %v1143 = vsel %vm344, 0.0, %v1141
        %v1144 = vsel %vm346, %v1143, 0.0
        %v1145 = vadd.f32 %v1107, %v1144
        %s1146 = sld [smem:[#allocation3 + $0xb80]]
        %v1147 = vstv %s1146
        %v1148 = vmul.f32 %v1147, %v261
        %s1149 = sld [smem:[#allocation3 + $0xb81]]
        %v1150 = vstv %s1149
        %v1151 = vmul.f32 %v1150, %v263
        %v1152 = vadd.f32 %v1148, %v1151
        %s1153 = sld [smem:[#allocation3 + $0xb82]]
        %v1154 = vstv %s1153
        %v1155 = vmul.f32 %v1154, %v265
        %v1156 = vadd.f32 %v1152, %v1155
        %s1157 = sld [smem:[#allocation3 + $0xb83]]
        %v1158 = vstv %s1157
        %v1159 = vmul.f32 %v1158, %v267
        %v1160 = vadd.f32 %v1156, %v1159
        %s1161 = sld [smem:[#allocation3 + $0xb84]]
        %v1162 = vstv %s1161
        %v1163 = vmul.f32 %v1162, %v269
        %v1164 = vadd.f32 %v1160, %v1163
        %s1165 = sld [smem:[#allocation3 + $0xb85]]
        %v1166 = vstv %s1165
        %v1167 = vmul.f32 %v1166, %v271
        %v1168 = vadd.f32 %v1164, %v1167
        %s1169 = sld [smem:[#allocation3 + $0xb86]]
        %v1170 = vstv %s1169
        %v1171 = vmul.f32 %v1170, %v273
        %v1172 = vadd.f32 %v1168, %v1171
        %s1173 = sld [smem:[#allocation3 + $0xb87]]
        %v1174 = vstv %s1173
        %v1175 = vmul.f32 %v1174, %v275
        %v1176 = vadd.f32 %v1172, %v1175
        %1178 = vrot.lane.b32.xlu0 %v1176, 2
        %v1179 = vpop.permute.xlu0 %1178
        %v1181 = vsel %vm384, 0.0, %v1179
        %v1182 = vadd.f32 %v1145, %v1181
        %s1183 = sld [smem:[#allocation6 + $0x7]]
        %v1184 = vstv %s1183
        %v1185 = vadd.f32 %v1182, %v1184
        %v1186 = vxor.u32 %v1185, 2147483648
        %v1187 = vmul.f32 %v1186, 1.442695
        %v1188 = vpow.pop %v1187
        %v1189 = vadd.f32 %v1188, 1.0
        %v1190 = vrcp.pop %v1189
        %v1191 = vmul.f32 1.0, %v1190
        %v1192 = vmul.f32 %v1075, %v1191
        %s1193 = scalar_lea.vmem %s260, 24 [#allocation8]
        %1194 = vst.msk [vmem:[%s1193] sm:$0xff] %vm346, %v1192
        %s1195 = sand.u32 %s95, 1
        %s1196 = scalar_lea.sflag [#allocation4], %s1195
        %s1197 = sand.u32 %s95, 1
        %s1198 = smul.addr %s1197, 32
        %s1199 = scalar_lea.vmem [#allocation8], %s1198
        // Predicated region
        $region79: #{gate_conv_transpose2d_fw.1} parent=65 // pred_check
          %p1200 = pneg %p105
        $region80: #{gate_conv_transpose2d_fw.1} parent=65 // pred_check_branch
          %1202 = sbr.rel (%p1200) target = $region82
        $region81: #{gate_conv_transpose2d_fw.1} parent=65 // pred_region
          %s1204 = ssub.s32 512, 512
          %1205 = vsyncadd %s1196, %s1204
          %s1206 = smul.addr %s19, 128
          %s1207 = scalar_lea.hbm %s3, %s1206
          %s1208 = sshll.u32 %s1199, 4
          %s1209 = int_to_ptr.vmem [resolvable:$true] %s1208
          %1214 = dma.vmem_to_hbm [thread:$0]  %s1209, 512, %s1207, %s1196, 128, 256, 8
        $region82: #{gate_conv_transpose2d_fw.1} parent=65 // pred_fallthru
          _
      $region66: #{gate_conv_transpose2d_fw.1} parent=5 // pred_fallthru
        _
      %p1215 = scmp.le.s32.totalorder 2, %s14
      // Predicated region
      $region83: #{gate_conv_transpose2d_fw.1} parent=5 // pred_check
        %p1216 = pneg %p1215
      $region84: #{gate_conv_transpose2d_fw.1} parent=5 // pred_check_branch
        %1218 = sbr.rel (%p1216) target = $region86
      $region85: #{gate_conv_transpose2d_fw.1} parent=5 // pred_region
        %s1219 = ssub.s32 %s14, 2
        // Predicated region
        $region87: #{gate_conv_transpose2d_fw.1} parent=85 // pred_check
          %p1220 = pneg %p111
        $region88: #{gate_conv_transpose2d_fw.1} parent=85 // pred_check_branch
          %1222 = sbr.rel (%p1220) target = $region90
        $region89: #{gate_conv_transpose2d_fw.1} parent=85 // pred_region
          %s1223 = sand.u32 %s96, 1
          %s1224 = scalar_lea.sflag [#allocation4], %s1223
          %s1225 = sand.u32 %s96, 1
          %s1226 = smul.addr %s1225, 32
          %s1227 = scalar_lea.vmem [#allocation8], %s1226
          %1228 = dma.done %s1224, 512
        $region90: #{gate_conv_transpose2d_fw.1} parent=85 // pred_fallthru
          _
      $region86: #{gate_conv_transpose2d_fw.1} parent=5 // pred_fallthru
        _
    $region6: #{gate_conv_transpose2d_fw.1} parent=1 // loop_footer
      %s18 = sadd.s32 1, %s14
    $region7: #{gate_conv_transpose2d_fw.1} parent=1 // loop_footer_branch
      %13 = sbr.rel target = $region3
    $region8: #{gate_conv_transpose2d_fw.1} parent=1 // loop_exit
      _
    %1229 = vsyncpa [#allocation4], 1
    %s1230 = scalar_lea.sflag [#allocation4], 1
    %1231 = vsyncpa %s1230, 1
    %1232 = vsyncpa [#allocation5], 1
    %s1233 = scalar_lea.sflag [#allocation5], 1
    %1234 = vsyncpa %s1233, 1
    %1235 = vsyncpa [#allocation7], 1

</llo_original>
